<compile_context>
chip_gen: v7x
topology: tpu7x:2x2x1
jax: 0.10.0
libtpu: 0.0.40
codegen_flags: <defaults>
</compile_context>

<pallas_src>
import functools
import math

import jax
import jax.numpy as jnp
from jax import lax
from jax.experimental import pallas as pl
from jax.experimental.pallas import tpu as pltpu

FEAT_DIM = 128   # nn.Linear(tokens_dim, 128)
LANE = 128
SUBLANE = 8


def _round_up(n, m):
    return (n + m - 1) // m * m


def _choose_tile_b(batch, k_pad, itemsize):
    """Largest batch tile whose double-buffered x/y streams fit a conservative
    VMEM budget (leaves headroom on v7x's 64 MiB physical VMEM)."""
    budget = 24 * 1024 * 1024                 # bytes for the streaming buffers
    per_row = 2 * 2 * k_pad * itemsize        # x & y tiles, double-buffered
    tb = max(SUBLANE, min(512, budget // per_row))
    tb = int(tb) - int(tb) % SUBLANE
    b_up = _round_up(batch, SUBLANE)
    return min(tb, b_up)
    # TODO(synk): for very large tokens_dim a second (K) grid axis with f32
    # partial-feature accumulation before the normalize would be needed.


def _make_sim_loss_kernel(sim_type, n_moments, batch, tile_b, needs_mask):
    """Builds the Pallas kernel body + scratch shapes for a static sim_type."""
    inv_b = 1.0 / float(batch)

    def _mask(i):
        rows = lax.broadcasted_iota(jnp.int32, (tile_b, 1), 0) + i * tile_b
        return (rows < batch).astype(jnp.float32)

    def _features(v_ref, w_ref, b_ref):
        # MXU matmul in the input's native dtype, f32 accumulate.
        f = jnp.dot(v_ref[...], w_ref[...], preferred_element_type=jnp.float32)
        f = f + b_ref[...].astype(jnp.float32)
        # F.normalize(., dim=-1)  ==  v * rsqrt(max(||v||^2, 1e-24))
        sq = jnp.sum(f * f, axis=-1, keepdims=True)
        return f * lax.rsqrt(jnp.maximum(sq, 1e-24))

    if sim_type == "cmd":

        def kernel(x_ref, y_ref, wx_ref, bx_ref, wy_ref, by_ref, o_ref,
                   momx_ref, momy_ref):
            i = pl.program_id(0)

            @pl.when(i == 0)
            def _():
                momx_ref[...] = jnp.zeros_like(momx_ref)
                momy_ref[...] = jnp.zeros_like(momy_ref)

            xf = _features(x_ref, wx_ref, bx_ref)
            yf = _features(y_ref, wy_ref, by_ref)
            if needs_mask:
                m = _mask(i)
                xf = xf * m
                yf = yf * m

            # Accumulate raw per-lane power sums  sum_b x^k  (incremental powers).
            px, py = xf, yf
            for k in range(n_moments):
                momx_ref[k:k + 1, :] = momx_ref[k:k + 1, :] + jnp.sum(
                    px, axis=0, keepdims=True)
                momy_ref[k:k + 1, :] = momy_ref[k:k + 1, :] + jnp.sum(
                    py, axis=0, keepdims=True)
                if k + 1 < n_moments:
                    px = px * xf
                    py = py * yf

            @pl.when(i == pl.num_programs(0) - 1)
            def _():
                mx = [momx_ref[k:k + 1, :] * inv_b for k in range(n_moments)]
                my = [momy_ref[k:k + 1, :] * inv_b for k in range(n_moments)]

                def central(raw, k):
                    # E[(x - m1)^k] from raw moments via binomial expansion.
                    negm = -raw[0]
                    pw = [jnp.ones_like(negm)]
                    for _ in range(k):
                        pw.append(pw[-1] * negm)
                    ck = pw[k]
                    for j in range(1, k + 1):
                        ck = ck + float(math.comb(k, j)) * raw[j - 1] * pw[k - j]
                    return ck

                d = mx[0] - my[0]                    # matchnorm of the means
                loss = jnp.sqrt(jnp.sum(d * d))
                for k in range(2, n_moments + 1):    # scm for k = 2..n_moments
                    d = central(mx, k) - central(my, k)
                    loss = loss + jnp.sqrt(jnp.sum(d * d))
                o_ref[...] = jnp.reshape(loss, (1, 1)).astype(jnp.float32)

        scratch = [pltpu.VMEM((n_moments, FEAT_DIM), jnp.float32),
                   pltpu.VMEM((n_moments, FEAT_DIM), jnp.float32)]
        return kernel, scratch

    if sim_type in ("kl", "cos"):

        def kernel(x_ref, y_ref, wx_ref, bx_ref, wy_ref, by_ref, o_ref, acc_ref):
            i = pl.program_id(0)

            @pl.when(i == 0)
            def _():
                acc_ref[...] = jnp.zeros_like(acc_ref)

            xf = _features(x_ref, wx_ref, bx_ref)
            yf = _features(y_ref, wy_ref, by_ref)

            if sim_type == "kl":
                # Faithful to the reference: softmax is applied to the
                # L2-normalized features (x_feat / y_feat), not the raw fc out.
                log_q = xf - jax.nn.logsumexp(xf, axis=-1, keepdims=True)
                log_p = yf - jax.nn.logsumexp(yf, axis=-1, keepdims=True)
                contrib = jnp.exp(log_p) * (log_p - log_q)
            else:  # "cos": features are unit-norm -> cosine is a plain dot
                contrib = xf * yf

            if needs_mask:
                contrib = contrib * _mask(i)
            acc_ref[...] = acc_ref[...] + jnp.sum(contrib, axis=0, keepdims=True)

            @pl.when(i == pl.num_programs(0) - 1)
            def _():
                s = jnp.sum(acc_ref[...]) * inv_b
                loss = s if sim_type == "kl" else 1.0 - s
                o_ref[...] = jnp.reshape(loss, (1, 1)).astype(jnp.float32)

        scratch = [pltpu.VMEM((1, FEAT_DIM), jnp.float32)]
        return kernel, scratch

    raise ValueError(f"unsupported sim_type: {sim_type}")


@functools.partial(jax.jit, static_argnames=("sim_type", "n_moments"))
def sim_loss(x, y, wx_t, bx, wy_t, by, sim_type="cmd", n_moments=5):
    """Pallas implementation of Sim_Loss.forward(x, y, sim_type).

    x, y      : (batch, tokens_dim)
    wx_t/wy_t : (tokens_dim, 128)  -- torch Linear weight, transposed
    bx/by     : (128,) or (1, 128)
    returns   : scalar float32 loss
    """
    if sim_type not in ("cmd", "kl", "cos"):
        # Reference returns zeros for unknown sim_type; no kernel needed.
        return jnp.zeros((), jnp.float32)

    batch, k = x.shape
    bx = jnp.reshape(bx, (1, FEAT_DIM))
    by = jnp.reshape(by, (1, FEAT_DIM))

    # Pad tokens_dim to a lane multiple (zero cols in x/y, zero rows in W).
    k_pad = _round_up(k, LANE)
    if k_pad != k:
        pad_k = k_pad - k
        x = jnp.pad(x, ((0, 0), (0, pad_k)))
        y = jnp.pad(y, ((0, 0), (0, pad_k)))
        wx_t = jnp.pad(wx_t, ((0, pad_k), (0, 0)))
        wy_t = jnp.pad(wy_t, ((0, pad_k), (0, 0)))

    tile_b = _choose_tile_b(batch, k_pad, x.dtype.itemsize)
    b_pad = _round_up(batch, tile_b)
    if b_pad != batch:
        x = jnp.pad(x, ((0, b_pad - batch), (0, 0)))
        y = jnp.pad(y, ((0, b_pad - batch), (0, 0)))
    num_tiles = b_pad // tile_b
    needs_mask = b_pad != batch

    kernel, scratch = _make_sim_loss_kernel(
        sim_type, n_moments, batch, tile_b, needs_mask)

    xy_spec = pl.BlockSpec((tile_b, k_pad), lambda i: (i, 0))       # streamed
    w_spec = pl.BlockSpec((k_pad, FEAT_DIM), lambda i: (0, 0))      # resident
    b_spec = pl.BlockSpec((1, FEAT_DIM), lambda i: (0, 0))          # resident
    out_spec = pl.BlockSpec((1, 1), lambda i: (0, 0))               # accumulator

    out = pl.pallas_call(
        kernel,
        out_shape=jax.ShapeDtypeStruct((1, 1), jnp.float32),
        grid_spec=pltpu.PrefetchScalarGridSpec(
            num_scalar_prefetch=0,
            grid=(num_tiles,),
            in_specs=[xy_spec, xy_spec, w_spec, b_spec, w_spec, b_spec],
            out_specs=out_spec,
            scratch_shapes=scratch,
        ),
        compiler_params=pltpu.CompilerParams(
            # The batch axis carries the scratch accumulator -> "arbitrary".
            # TODO(synk): emit per-core partial moment/sum outputs + a wrapper
            # reduce so the batch axis can be "parallel" on v7x's 2 TCs.
            dimension_semantics=("arbitrary",),
            vmem_limit_bytes=48 * 1024 * 1024,
        ),
    )(x, y, wx_t, bx, wy_t, by)
    return out[0, 0]


def _sim_loss_ref(x, y, wx_t, bx, wy_t, by, sim_type, n_moments=5):
    """Pure-JAX reference (direct translation of the PyTorch module)."""
    xf = x @ wx_t + jnp.reshape(bx, (1, -1))
    yf = y @ wy_t + jnp.reshape(by, (1, -1))
    xf = xf / jnp.maximum(jnp.linalg.norm(xf, axis=-1, keepdims=True), 1e-12)
    yf = yf / jnp.maximum(jnp.linalg.norm(yf, axis=-1, keepdims=True), 1e-12)
    if sim_type == "cmd":
        mx1 = jnp.mean(xf, axis=0)
        mx2 = jnp.mean(yf, axis=0)
        sx1 = xf - mx1
        sx2 = yf - mx2
        loss = jnp.sqrt(jnp.sum((mx1 - mx2) ** 2))
        for k in range(2, n_moments + 1):
            ss1 = jnp.mean(sx1 ** k, axis=0)
            ss2 = jnp.mean(sx2 ** k, axis=0)
            loss = loss + jnp.sqrt(jnp.sum((ss1 - ss2) ** 2))
        return loss
    if sim_type == "kl":
        log_q = jax.nn.log_softmax(xf, axis=-1)
        log_p = jax.nn.log_softmax(yf, axis=-1)
        return jnp.sum(jnp.exp(log_p) * (log_p - log_q)) / xf.shape[0]
    if sim_type == "cos":
        return jnp.mean(1.0 - jnp.sum(xf * yf, axis=-1))
    return jnp.zeros((), jnp.float32)


def _make_inputs(batch, tokens_dim, key):
    kx, ky, k1, k2, k3, k4 = jax.random.split(key, 6)
    x = jax.random.normal(kx, (batch, tokens_dim), jnp.float32)
    y = jax.random.normal(ky, (batch, tokens_dim), jnp.float32)
    bound = 1.0 / (tokens_dim ** 0.5)
    wx_t = jax.random.uniform(k1, (tokens_dim, FEAT_DIM), jnp.float32, -bound, bound)
    bx = jax.random.uniform(k2, (1, FEAT_DIM), jnp.float32, -bound, bound)
    wy_t = jax.random.uniform(k3, (tokens_dim, FEAT_DIM), jnp.float32, -bound, bound)
    by = jax.random.uniform(k4, (1, FEAT_DIM), jnp.float32, -bound, bound)
    return x, y, wx_t, bx, wy_t, by


if __name__ == "__main__":
    # Align in-kernel and reference matmul precision for the numeric check.
    jax.config.update("jax_default_matmul_precision", "highest")

    key = jax.random.PRNGKey(0)
    k_small, k_big = jax.random.split(key, 2)

    # (batch, tokens_dim): small case (module-typical toy size) + a case that
    # exercises lane/batch padding, masking and a multi-tile grid.
    cases = [
        _make_inputs(8, 32, k_small),
        _make_inputs(520, 96, k_big),
    ]

    for args in cases:
        for st in ("cmd", "kl", "cos", "none"):
            got = jax.block_until_ready(sim_loss(*args, sim_type=st))
            ref = jax.block_until_ready(_sim_loss_ref(*args, st))
            g, r = float(got), float(ref)
            assert bool(jnp.isfinite(got)), f"non-finite loss for {st}"
            assert abs(g - r) <= 1e-4 + 2e-2 * abs(r), (
                f"mismatch for sim_type={st}: got {g}, ref {r}")

    print("KERNEL_OK")
</pallas_src>

<mosaic_0001>
module attributes {stable_mosaic.version = 11 : i64} {
  func.func @kernel(%arg0: i32, %arg1: memref<8x128xf32, #tpu.memory_space<vmem>>, %arg2: memref<8x128xf32, #tpu.memory_space<vmem>>, %arg3: memref<128x128xf32, #tpu.memory_space<vmem>>, %arg4: memref<1x128xf32, #tpu.memory_space<vmem>>, %arg5: memref<128x128xf32, #tpu.memory_space<vmem>>, %arg6: memref<1x128xf32, #tpu.memory_space<vmem>>, %arg7: memref<1x1xf32, #tpu.memory_space<vmem>>, %arg8: memref<5x128xf32, #tpu.memory_space<vmem>>, %arg9: memref<5x128xf32, #tpu.memory_space<vmem>>) attributes {dimension_semantics = [#tpu.dimension_semantics<arbitrary>], iteration_bounds = array<i64: 1>, scalar_prefetch = 0 : i64, scratch_operands = 2 : i64, tpu.core_type = #tpu.core_type<tc>, window_params = [{transform_indices = @transform_0, window_bounds = array<i64: 8, 128>}, {transform_indices = @transform_1, window_bounds = array<i64: 8, 128>}, {pipeline_mode = #tpu.pipeline_mode<synchronous>, transform_indices = @transform_2, window_bounds = array<i64: 128, 128>}, {pipeline_mode = #tpu.pipeline_mode<synchronous>, transform_indices = @transform_3, window_bounds = array<i64: 1, 128>}, {pipeline_mode = #tpu.pipeline_mode<synchronous>, transform_indices = @transform_4, window_bounds = array<i64: 128, 128>}, {pipeline_mode = #tpu.pipeline_mode<synchronous>, transform_indices = @transform_5, window_bounds = array<i64: 1, 128>}, {pipeline_mode = #tpu.pipeline_mode<synchronous>, transform_indices = @transform_6, window_bounds = array<i64: 1, 1>}]} {
    %c0_i32 = arith.constant 0 : i32
    %0 = arith.cmpi eq, %arg0, %c0_i32 : i32
    %1 = arith.extui %0 : i1 to i32
    %c0_i32_0 = arith.constant 0 : i32
    %2 = arith.cmpi ne, %1, %c0_i32_0 : i32
    scf.if %2 {
      %cst_65 = arith.constant 0.000000e+00 : f32
      %92 = vector.broadcast %cst_65 : f32 to vector<5x128xf32>
      %c0_66 = arith.constant 0 : index
      %c0_67 = arith.constant 0 : index
      %93 = vector.load %arg8[%c0_66, %c0_67] : memref<5x128xf32, #tpu.memory_space<vmem>>, vector<5x128xf32>
      tpu.vector_store %arg8[%c0_66, %c0_67], %92 {strides = array<i32>} : memref<5x128xf32, #tpu.memory_space<vmem>>, vector<5x128xf32>,
      %cst_68 = arith.constant 0.000000e+00 : f32
      %94 = vector.broadcast %cst_68 : f32 to vector<5x128xf32>
      %c0_69 = arith.constant 0 : index
      %c0_70 = arith.constant 0 : index
      %95 = vector.load %arg9[%c0_69, %c0_70] : memref<5x128xf32, #tpu.memory_space<vmem>>, vector<5x128xf32>
      tpu.vector_store %arg9[%c0_69, %c0_70], %94 {strides = array<i32>} : memref<5x128xf32, #tpu.memory_space<vmem>>, vector<5x128xf32>,
    } else {
    }
    %c0 = arith.constant 0 : index
    %c0_1 = arith.constant 0 : index
    %3 = vector.load %arg1[%c0, %c0_1] : memref<8x128xf32, #tpu.memory_space<vmem>>, vector<8x128xf32>
    %c0_2 = arith.constant 0 : index
    %c0_3 = arith.constant 0 : index
    %4 = vector.load %arg3[%c0_2, %c0_3] : memref<128x128xf32, #tpu.memory_space<vmem>>, vector<128x128xf32>
    %cst = arith.constant dense<0.000000e+00> : vector<8x128xf32>
    %5 = tpu.matmul %3, %4, %cst {dimension_numbers = #tpu.dot_dimension_numbers<[1], [0], [0], [1], [0, 0, 1, 1], [], []>, precision = #tpu.contract_precision<fp32>} : vector<8x128xf32>, vector<128x128xf32>, vector<8x128xf32> -> vector<8x128xf32>
    %c0_4 = arith.constant 0 : index
    %c0_5 = arith.constant 0 : index
    %6 = vector.load %arg4[%c0_4, %c0_5] : memref<1x128xf32, #tpu.memory_space<vmem>>, vector<1x128xf32>
    %7 = vector.broadcast %6 : vector<1x128xf32> to vector<8x128xf32>
    %8 = arith.addf %5, %7 : vector<8x128xf32>
    %9 = arith.mulf %8, %8 : vector<8x128xf32>
    %cst_6 = arith.constant dense<0.000000e+00> : vector<8xf32>
    %10 = vector.multi_reduction <add>, %9, %cst_6 [1] : vector<8x128xf32> to vector<8xf32>
    %11 = vector.shape_cast %10 : vector<8xf32> to vector<8x1xf32>
    %cst_7 = arith.constant 1.000000e-24 : f32
    %12 = vector.broadcast %cst_7 : f32 to vector<8x1xf32>
    %13 = arith.maximumf %11, %12 : vector<8x1xf32>
    %14 = math.rsqrt %13 : vector<8x1xf32>
    %15 = vector.broadcast %14 : vector<8x1xf32> to vector<8x128xf32>
    %16 = arith.mulf %8, %15 : vector<8x128xf32>
    %c0_8 = arith.constant 0 : index
    %c0_9 = arith.constant 0 : index
    %17 = vector.load %arg2[%c0_8, %c0_9] : memref<8x128xf32, #tpu.memory_space<vmem>>, vector<8x128xf32>
    %c0_10 = arith.constant 0 : index
    %c0_11 = arith.constant 0 : index
    %18 = vector.load %arg5[%c0_10, %c0_11] : memref<128x128xf32, #tpu.memory_space<vmem>>, vector<128x128xf32>
    %cst_12 = arith.constant dense<0.000000e+00> : vector<8x128xf32>
    %19 = tpu.matmul %17, %18, %cst_12 {dimension_numbers = #tpu.dot_dimension_numbers<[1], [0], [0], [1], [0, 0, 1, 1], [], []>, precision = #tpu.contract_precision<fp32>} : vector<8x128xf32>, vector<128x128xf32>, vector<8x128xf32> -> vector<8x128xf32>
    %c0_13 = arith.constant 0 : index
    %c0_14 = arith.constant 0 : index
    %20 = vector.load %arg6[%c0_13, %c0_14] : memref<1x128xf32, #tpu.memory_space<vmem>>, vector<1x128xf32>
    %21 = vector.broadcast %20 : vector<1x128xf32> to vector<8x128xf32>
    %22 = arith.addf %19, %21 : vector<8x128xf32>
    %23 = arith.mulf %22, %22 : vector<8x128xf32>
    %cst_15 = arith.constant dense<0.000000e+00> : vector<8xf32>
    %24 = vector.multi_reduction <add>, %23, %cst_15 [1] : vector<8x128xf32> to vector<8xf32>
    %25 = vector.shape_cast %24 : vector<8xf32> to vector<8x1xf32>
    %cst_16 = arith.constant 1.000000e-24 : f32
    %26 = vector.broadcast %cst_16 : f32 to vector<8x1xf32>
    %27 = arith.maximumf %25, %26 : vector<8x1xf32>
    %28 = math.rsqrt %27 : vector<8x1xf32>
    %29 = vector.broadcast %28 : vector<8x1xf32> to vector<8x128xf32>
    %30 = arith.mulf %22, %29 : vector<8x128xf32>
    %c0_17 = arith.constant 0 : index
    %c0_18 = arith.constant 0 : index
    %31 = vector.load %arg8[%c0_17, %c0_18] : memref<5x128xf32, #tpu.memory_space<vmem>>, vector<1x128xf32>
    %cst_19 = arith.constant dense<0.000000e+00> : vector<128xf32>
    %32 = vector.multi_reduction <add>, %16, %cst_19 [0] : vector<8x128xf32> to vector<128xf32>
    %33 = vector.shape_cast %32 : vector<128xf32> to vector<1x128xf32>
    %34 = arith.addf %31, %33 : vector<1x128xf32>
    %c0_20 = arith.constant 0 : index
    %c0_21 = arith.constant 0 : index
    %35 = vector.load %arg8[%c0_20, %c0_21] : memref<5x128xf32, #tpu.memory_space<vmem>>, vector<1x128xf32>
    tpu.vector_store %arg8[%c0_20, %c0_21], %34 {strides = array<i32>} : memref<5x128xf32, #tpu.memory_space<vmem>>, vector<1x128xf32>,
    %c0_22 = arith.constant 0 : index
    %c0_23 = arith.constant 0 : index
    %36 = vector.load %arg9[%c0_22, %c0_23] : memref<5x128xf32, #tpu.memory_space<vmem>>, vector<1x128xf32>
    %cst_24 = arith.constant dense<0.000000e+00> : vector<128xf32>
    %37 = vector.multi_reduction <add>, %30, %cst_24 [0] : vector<8x128xf32> to vector<128xf32>
    %38 = vector.shape_cast %37 : vector<128xf32> to vector<1x128xf32>
    %39 = arith.addf %36, %38 : vector<1x128xf32>
    %c0_25 = arith.constant 0 : index
    %c0_26 = arith.constant 0 : index
    %40 = vector.load %arg9[%c0_25, %c0_26] : memref<5x128xf32, #tpu.memory_space<vmem>>, vector<1x128xf32>
    tpu.vector_store %arg9[%c0_25, %c0_26], %39 {strides = array<i32>} : memref<5x128xf32, #tpu.memory_space<vmem>>, vector<1x128xf32>,
    %41 = arith.mulf %16, %16 : vector<8x128xf32>
    %42 = arith.mulf %30, %30 : vector<8x128xf32>
    %c1 = arith.constant 1 : index
    %c0_27 = arith.constant 0 : index
    %43 = vector.load %arg8[%c1, %c0_27] : memref<5x128xf32, #tpu.memory_space<vmem>>, vector<1x128xf32>
    %cst_28 = arith.constant dense<0.000000e+00> : vector<128xf32>
    %44 = vector.multi_reduction <add>, %41, %cst_28 [0] : vector<8x128xf32> to vector<128xf32>
    %45 = vector.shape_cast %44 : vector<128xf32> to vector<1x128xf32>
    %46 = arith.addf %43, %45 : vector<1x128xf32>
    %c1_29 = arith.constant 1 : index
    %c0_30 = arith.constant 0 : index
    %47 = vector.load %arg8[%c1_29, %c0_30] : memref<5x128xf32, #tpu.memory_space<vmem>>, vector<1x128xf32>
    tpu.vector_store %arg8[%c1_29, %c0_30], %46 {strides = array<i32>} : memref<5x128xf32, #tpu.memory_space<vmem>>, vector<1x128xf32>,
    %c1_31 = arith.constant 1 : index
    %c0_32 = arith.constant 0 : index
    %48 = vector.load %arg9[%c1_31, %c0_32] : memref<5x128xf32, #tpu.memory_space<vmem>>, vector<1x128xf32>
    %cst_33 = arith.constant dense<0.000000e+00> : vector<128xf32>
    %49 = vector.multi_reduction <add>, %42, %cst_33 [0] : vector<8x128xf32> to vector<128xf32>
    %50 = vector.shape_cast %49 : vector<128xf32> to vector<1x128xf32>
    %51 = arith.addf %48, %50 : vector<1x128xf32>
    %c1_34 = arith.constant 1 : index
    %c0_35 = arith.constant 0 : index
    %52 = vector.load %arg9[%c1_34, %c0_35] : memref<5x128xf32, #tpu.memory_space<vmem>>, vector<1x128xf32>
    tpu.vector_store %arg9[%c1_34, %c0_35], %51 {strides = array<i32>} : memref<5x128xf32, #tpu.memory_space<vmem>>, vector<1x128xf32>,
    %53 = arith.mulf %41, %16 : vector<8x128xf32>
    %54 = arith.mulf %42, %30 : vector<8x128xf32>
    %c2 = arith.constant 2 : index
    %c0_36 = arith.constant 0 : index
    %55 = vector.load %arg8[%c2, %c0_36] : memref<5x128xf32, #tpu.memory_space<vmem>>, vector<1x128xf32>
    %cst_37 = arith.constant dense<0.000000e+00> : vector<128xf32>
    %56 = vector.multi_reduction <add>, %53, %cst_37 [0] : vector<8x128xf32> to vector<128xf32>
    %57 = vector.shape_cast %56 : vector<128xf32> to vector<1x128xf32>
    %58 = arith.addf %55, %57 : vector<1x128xf32>
    %c2_38 = arith.constant 2 : index
    %c0_39 = arith.constant 0 : index
    %59 = vector.load %arg8[%c2_38, %c0_39] : memref<5x128xf32, #tpu.memory_space<vmem>>, vector<1x128xf32>
    tpu.vector_store %arg8[%c2_38, %c0_39], %58 {strides = array<i32>} : memref<5x128xf32, #tpu.memory_space<vmem>>, vector<1x128xf32>,
    %c2_40 = arith.constant 2 : index
    %c0_41 = arith.constant 0 : index
    %60 = vector.load %arg9[%c2_40, %c0_41] : memref<5x128xf32, #tpu.memory_space<vmem>>, vector<1x128xf32>
    %cst_42 = arith.constant dense<0.000000e+00> : vector<128xf32>
    %61 = vector.multi_reduction <add>, %54, %cst_42 [0] : vector<8x128xf32> to vector<128xf32>
    %62 = vector.shape_cast %61 : vector<128xf32> to vector<1x128xf32>
    %63 = arith.addf %60, %62 : vector<1x128xf32>
    %c2_43 = arith.constant 2 : index
    %c0_44 = arith.constant 0 : index
    %64 = vector.load %arg9[%c2_43, %c0_44] : memref<5x128xf32, #tpu.memory_space<vmem>>, vector<1x128xf32>
    tpu.vector_store %arg9[%c2_43, %c0_44], %63 {strides = array<i32>} : memref<5x128xf32, #tpu.memory_space<vmem>>, vector<1x128xf32>,
    %65 = arith.mulf %53, %16 : vector<8x128xf32>
    %66 = arith.mulf %54, %30 : vector<8x128xf32>
    %c3 = arith.constant 3 : index
    %c0_45 = arith.constant 0 : index
    %67 = vector.load %arg8[%c3, %c0_45] : memref<5x128xf32, #tpu.memory_space<vmem>>, vector<1x128xf32>
    %cst_46 = arith.constant dense<0.000000e+00> : vector<128xf32>
    %68 = vector.multi_reduction <add>, %65, %cst_46 [0] : vector<8x128xf32> to vector<128xf32>
    %69 = vector.shape_cast %68 : vector<128xf32> to vector<1x128xf32>
    %70 = arith.addf %67, %69 : vector<1x128xf32>
    %c3_47 = arith.constant 3 : index
    %c0_48 = arith.constant 0 : index
    %71 = vector.load %arg8[%c3_47, %c0_48] : memref<5x128xf32, #tpu.memory_space<vmem>>, vector<1x128xf32>
    tpu.vector_store %arg8[%c3_47, %c0_48], %70 {strides = array<i32>} : memref<5x128xf32, #tpu.memory_space<vmem>>, vector<1x128xf32>,
    %c3_49 = arith.constant 3 : index
    %c0_50 = arith.constant 0 : index
    %72 = vector.load %arg9[%c3_49, %c0_50] : memref<5x128xf32, #tpu.memory_space<vmem>>, vector<1x128xf32>
    %cst_51 = arith.constant dense<0.000000e+00> : vector<128xf32>
    %73 = vector.multi_reduction <add>, %66, %cst_51 [0] : vector<8x128xf32> to vector<128xf32>
    %74 = vector.shape_cast %73 : vector<128xf32> to vector<1x128xf32>
    %75 = arith.addf %72, %74 : vector<1x128xf32>
    %c3_52 = arith.constant 3 : index
    %c0_53 = arith.constant 0 : index
    %76 = vector.load %arg9[%c3_52, %c0_53] : memref<5x128xf32, #tpu.memory_space<vmem>>, vector<1x128xf32>
    tpu.vector_store %arg9[%c3_52, %c0_53], %75 {strides = array<i32>} : memref<5x128xf32, #tpu.memory_space<vmem>>, vector<1x128xf32>,
    %77 = arith.mulf %65, %16 : vector<8x128xf32>
    %78 = arith.mulf %66, %30 : vector<8x128xf32>
    %c4 = arith.constant 4 : index
    %c0_54 = arith.constant 0 : index
    %79 = vector.load %arg8[%c4, %c0_54] : memref<5x128xf32, #tpu.memory_space<vmem>>, vector<1x128xf32>
    %cst_55 = arith.constant dense<0.000000e+00> : vector<128xf32>
    %80 = vector.multi_reduction <add>, %77, %cst_55 [0] : vector<8x128xf32> to vector<128xf32>
    %81 = vector.shape_cast %80 : vector<128xf32> to vector<1x128xf32>
    %82 = arith.addf %79, %81 : vector<1x128xf32>
    %c4_56 = arith.constant 4 : index
    %c0_57 = arith.constant 0 : index
    %83 = vector.load %arg8[%c4_56, %c0_57] : memref<5x128xf32, #tpu.memory_space<vmem>>, vector<1x128xf32>
    tpu.vector_store %arg8[%c4_56, %c0_57], %82 {strides = array<i32>} : memref<5x128xf32, #tpu.memory_space<vmem>>, vector<1x128xf32>,
    %c4_58 = arith.constant 4 : index
    %c0_59 = arith.constant 0 : index
    %84 = vector.load %arg9[%c4_58, %c0_59] : memref<5x128xf32, #tpu.memory_space<vmem>>, vector<1x128xf32>
    %cst_60 = arith.constant dense<0.000000e+00> : vector<128xf32>
    %85 = vector.multi_reduction <add>, %78, %cst_60 [0] : vector<8x128xf32> to vector<128xf32>
    %86 = vector.shape_cast %85 : vector<128xf32> to vector<1x128xf32>
    %87 = arith.addf %84, %86 : vector<1x128xf32>
    %c4_61 = arith.constant 4 : index
    %c0_62 = arith.constant 0 : index
    %88 = vector.load %arg9[%c4_61, %c0_62] : memref<5x128xf32, #tpu.memory_space<vmem>>, vector<1x128xf32>
    tpu.vector_store %arg9[%c4_61, %c0_62], %87 {strides = array<i32>} : memref<5x128xf32, #tpu.memory_space<vmem>>, vector<1x128xf32>,
    %c0_i32_63 = arith.constant 0 : i32
    %89 = arith.cmpi eq, %arg0, %c0_i32_63 : i32
    %90 = arith.extui %89 : i1 to i32
    %c0_i32_64 = arith.constant 0 : i32
    %91 = arith.cmpi ne, %90, %c0_i32_64 : i32
    scf.if %91 {
      %c0_65 = arith.constant 0 : index
      %c0_66 = arith.constant 0 : index
      %92 = vector.load %arg8[%c0_65, %c0_66] : memref<5x128xf32, #tpu.memory_space<vmem>>, vector<1x128xf32>
      %cst_67 = arith.constant 1.250000e-01 : f32
      %93 = vector.broadcast %cst_67 : f32 to vector<1x128xf32>
      %94 = arith.mulf %92, %93 : vector<1x128xf32>
      %c1_68 = arith.constant 1 : index
      %c0_69 = arith.constant 0 : index
      %95 = vector.load %arg8[%c1_68, %c0_69] : memref<5x128xf32, #tpu.memory_space<vmem>>, vector<1x128xf32>
      %cst_70 = arith.constant 1.250000e-01 : f32
      %96 = vector.broadcast %cst_70 : f32 to vector<1x128xf32>
      %97 = arith.mulf %95, %96 : vector<1x128xf32>
      %c2_71 = arith.constant 2 : index
      %c0_72 = arith.constant 0 : index
      %98 = vector.load %arg8[%c2_71, %c0_72] : memref<5x128xf32, #tpu.memory_space<vmem>>, vector<1x128xf32>
      %cst_73 = arith.constant 1.250000e-01 : f32
      %99 = vector.broadcast %cst_73 : f32 to vector<1x128xf32>
      %100 = arith.mulf %98, %99 : vector<1x128xf32>
      %c3_74 = arith.constant 3 : index
      %c0_75 = arith.constant 0 : index
      %101 = vector.load %arg8[%c3_74, %c0_75] : memref<5x128xf32, #tpu.memory_space<vmem>>, vector<1x128xf32>
      %cst_76 = arith.constant 1.250000e-01 : f32
      %102 = vector.broadcast %cst_76 : f32 to vector<1x128xf32>
      %103 = arith.mulf %101, %102 : vector<1x128xf32>
      %c4_77 = arith.constant 4 : index
      %c0_78 = arith.constant 0 : index
      %104 = vector.load %arg8[%c4_77, %c0_78] : memref<5x128xf32, #tpu.memory_space<vmem>>, vector<1x128xf32>
      %cst_79 = arith.constant 1.250000e-01 : f32
      %105 = vector.broadcast %cst_79 : f32 to vector<1x128xf32>
      %106 = arith.mulf %104, %105 : vector<1x128xf32>
      %c0_80 = arith.constant 0 : index
      %c0_81 = arith.constant 0 : index
      %107 = vector.load %arg9[%c0_80, %c0_81] : memref<5x128xf32, #tpu.memory_space<vmem>>, vector<1x128xf32>
      %cst_82 = arith.constant 1.250000e-01 : f32
      %108 = vector.broadcast %cst_82 : f32 to vector<1x128xf32>
      %109 = arith.mulf %107, %108 : vector<1x128xf32>
      %c1_83 = arith.constant 1 : index
      %c0_84 = arith.constant 0 : index
      %110 = vector.load %arg9[%c1_83, %c0_84] : memref<5x128xf32, #tpu.memory_space<vmem>>, vector<1x128xf32>
      %cst_85 = arith.constant 1.250000e-01 : f32
      %111 = vector.broadcast %cst_85 : f32 to vector<1x128xf32>
      %112 = arith.mulf %110, %111 : vector<1x128xf32>
      %c2_86 = arith.constant 2 : index
      %c0_87 = arith.constant 0 : index
      %113 = vector.load %arg9[%c2_86, %c0_87] : memref<5x128xf32, #tpu.memory_space<vmem>>, vector<1x128xf32>
      %cst_88 = arith.constant 1.250000e-01 : f32
      %114 = vector.broadcast %cst_88 : f32 to vector<1x128xf32>
      %115 = arith.mulf %113, %114 : vector<1x128xf32>
      %c3_89 = arith.constant 3 : index
      %c0_90 = arith.constant 0 : index
      %116 = vector.load %arg9[%c3_89, %c0_90] : memref<5x128xf32, #tpu.memory_space<vmem>>, vector<1x128xf32>
      %cst_91 = arith.constant 1.250000e-01 : f32
      %117 = vector.broadcast %cst_91 : f32 to vector<1x128xf32>
      %118 = arith.mulf %116, %117 : vector<1x128xf32>
      %c4_92 = arith.constant 4 : index
      %c0_93 = arith.constant 0 : index
      %119 = vector.load %arg9[%c4_92, %c0_93] : memref<5x128xf32, #tpu.memory_space<vmem>>, vector<1x128xf32>
      %cst_94 = arith.constant 1.250000e-01 : f32
      %120 = vector.broadcast %cst_94 : f32 to vector<1x128xf32>
      %121 = arith.mulf %119, %120 : vector<1x128xf32>
      %122 = arith.subf %94, %109 : vector<1x128xf32>
      %123 = arith.mulf %122, %122 : vector<1x128xf32>
      %124 = vector.shape_cast %123 : vector<1x128xf32> to vector<1x1x128xf32>
      %cst_95 = arith.constant dense<0.000000e+00> : vector<1xf32>
      %125 = vector.multi_reduction <add>, %124, %cst_95 [1, 2] : vector<1x1x128xf32> to vector<1xf32>
      %126 = vector.shape_cast %125 : vector<1xf32> to vector<1x1x1xf32>
      %127 = vector.extract %126[0, 0, 0] : f32 from vector<1x1x1xf32>
      %128 = math.sqrt %127 : f32
      %cst_96 = arith.constant 0.000000e+00 : f32
      %129 = vector.broadcast %cst_96 : f32 to vector<1x128xf32>
      %130 = arith.subf %129, %94 : vector<1x128xf32>
      %cst_97 = arith.constant 1.000000e+00 : f32
      %131 = vector.broadcast %cst_97 : f32 to vector<1x128xf32>
      %132 = arith.mulf %131, %130 : vector<1x128xf32>
      %133 = arith.mulf %132, %130 : vector<1x128xf32>
      %cst_98 = arith.constant 2.000000e+00 : f32
      %134 = vector.broadcast %cst_98 : f32 to vector<1x128xf32>
      %135 = arith.mulf %134, %94 : vector<1x128xf32>
      %136 = arith.mulf %135, %132 : vector<1x128xf32>
      %137 = arith.addf %133, %136 : vector<1x128xf32>
      %cst_99 = arith.constant 1.000000e+00 : f32
      %138 = vector.broadcast %cst_99 : f32 to vector<1x128xf32>
      %139 = arith.mulf %138, %97 : vector<1x128xf32>
      %140 = arith.mulf %139, %131 : vector<1x128xf32>
      %141 = arith.addf %137, %140 : vector<1x128xf32>
      %cst_100 = arith.constant 0.000000e+00 : f32
      %142 = vector.broadcast %cst_100 : f32 to vector<1x128xf32>
      %143 = arith.subf %142, %109 : vector<1x128xf32>
      %cst_101 = arith.constant 1.000000e+00 : f32
      %144 = vector.broadcast %cst_101 : f32 to vector<1x128xf32>
      %145 = arith.mulf %144, %143 : vector<1x128xf32>
      %146 = arith.mulf %145, %143 : vector<1x128xf32>
      %cst_102 = arith.constant 2.000000e+00 : f32
      %147 = vector.broadcast %cst_102 : f32 to vector<1x128xf32>
      %148 = arith.mulf %147, %109 : vector<1x128xf32>
      %149 = arith.mulf %148, %145 : vector<1x128xf32>
      %150 = arith.addf %146, %149 : vector<1x128xf32>
      %cst_103 = arith.constant 1.000000e+00 : f32
      %151 = vector.broadcast %cst_103 : f32 to vector<1x128xf32>
      %152 = arith.mulf %151, %112 : vector<1x128xf32>
      %153 = arith.mulf %152, %144 : vector<1x128xf32>
      %154 = arith.addf %150, %153 : vector<1x128xf32>
      %155 = arith.subf %141, %154 : vector<1x128xf32>
      %156 = arith.mulf %155, %155 : vector<1x128xf32>
      %157 = vector.shape_cast %156 : vector<1x128xf32> to vector<1x1x128xf32>
      %cst_104 = arith.constant dense<0.000000e+00> : vector<1xf32>
      %158 = vector.multi_reduction <add>, %157, %cst_104 [1, 2] : vector<1x1x128xf32> to vector<1xf32>
      %159 = vector.shape_cast %158 : vector<1xf32> to vector<1x1x1xf32>
      %160 = vector.extract %159[0, 0, 0] : f32 from vector<1x1x1xf32>
      %161 = math.sqrt %160 : f32
      %162 = arith.addf %128, %161 : f32
      %cst_105 = arith.constant 0.000000e+00 : f32
      %163 = vector.broadcast %cst_105 : f32 to vector<1x128xf32>
      %164 = arith.subf %163, %94 : vector<1x128xf32>
      %cst_106 = arith.constant 1.000000e+00 : f32
      %165 = vector.broadcast %cst_106 : f32 to vector<1x128xf32>
      %166 = arith.mulf %165, %164 : vector<1x128xf32>
      %167 = arith.mulf %166, %164 : vector<1x128xf32>
      %168 = arith.mulf %167, %164 : vector<1x128xf32>
      %cst_107 = arith.constant 3.000000e+00 : f32
      %169 = vector.broadcast %cst_107 : f32 to vector<1x128xf32>
      %170 = arith.mulf %169, %94 : vector<1x128xf32>
      %171 = arith.mulf %170, %167 : vector<1x128xf32>
      %172 = arith.addf %168, %171 : vector<1x128xf32>
      %cst_108 = arith.constant 3.000000e+00 : f32
      %173 = vector.broadcast %cst_108 : f32 to vector<1x128xf32>
      %174 = arith.mulf %173, %97 : vector<1x128xf32>
      %175 = arith.mulf %174, %166 : vector<1x128xf32>
      %176 = arith.addf %172, %175 : vector<1x128xf32>
      %cst_109 = arith.constant 1.000000e+00 : f32
      %177 = vector.broadcast %cst_109 : f32 to vector<1x128xf32>
      %178 = arith.mulf %177, %100 : vector<1x128xf32>
      %179 = arith.mulf %178, %165 : vector<1x128xf32>
      %180 = arith.addf %176, %179 : vector<1x128xf32>
      %cst_110 = arith.constant 0.000000e+00 : f32
      %181 = vector.broadcast %cst_110 : f32 to vector<1x128xf32>
      %182 = arith.subf %181, %109 : vector<1x128xf32>
      %cst_111 = arith.constant 1.000000e+00 : f32
      %183 = vector.broadcast %cst_111 : f32 to vector<1x128xf32>
      %184 = arith.mulf %183, %182 : vector<1x128xf32>
      %185 = arith.mulf %184, %182 : vector<1x128xf32>
      %186 = arith.mulf %185, %182 : vector<1x128xf32>
      %cst_112 = arith.constant 3.000000e+00 : f32
      %187 = vector.broadcast %cst_112 : f32 to vector<1x128xf32>
      %188 = arith.mulf %187, %109 : vector<1x128xf32>
      %189 = arith.mulf %188, %185 : vector<1x128xf32>
      %190 = arith.addf %186, %189 : vector<1x128xf32>
      %cst_113 = arith.constant 3.000000e+00 : f32
      %191 = vector.broadcast %cst_113 : f32 to vector<1x128xf32>
      %192 = arith.mulf %191, %112 : vector<1x128xf32>
      %193 = arith.mulf %192, %184 : vector<1x128xf32>
      %194 = arith.addf %190, %193 : vector<1x128xf32>
      %cst_114 = arith.constant 1.000000e+00 : f32
      %195 = vector.broadcast %cst_114 : f32 to vector<1x128xf32>
      %196 = arith.mulf %195, %115 : vector<1x128xf32>
      %197 = arith.mulf %196, %183 : vector<1x128xf32>
      %198 = arith.addf %194, %197 : vector<1x128xf32>
      %199 = arith.subf %180, %198 : vector<1x128xf32>
      %200 = arith.mulf %199, %199 : vector<1x128xf32>
      %201 = vector.shape_cast %200 : vector<1x128xf32> to vector<1x1x128xf32>
      %cst_115 = arith.constant dense<0.000000e+00> : vector<1xf32>
      %202 = vector.multi_reduction <add>, %201, %cst_115 [1, 2] : vector<1x1x128xf32> to vector<1xf32>
      %203 = vector.shape_cast %202 : vector<1xf32> to vector<1x1x1xf32>
      %204 = vector.extract %203[0, 0, 0] : f32 from vector<1x1x1xf32>
      %205 = math.sqrt %204 : f32
      %206 = arith.addf %162, %205 : f32
      %cst_116 = arith.constant 0.000000e+00 : f32
      %207 = vector.broadcast %cst_116 : f32 to vector<1x128xf32>
      %208 = arith.subf %207, %94 : vector<1x128xf32>
      %cst_117 = arith.constant 1.000000e+00 : f32
      %209 = vector.broadcast %cst_117 : f32 to vector<1x128xf32>
      %210 = arith.mulf %209, %208 : vector<1x128xf32>
      %211 = arith.mulf %210, %208 : vector<1x128xf32>
      %212 = arith.mulf %211, %208 : vector<1x128xf32>
      %213 = arith.mulf %212, %208 : vector<1x128xf32>
      %cst_118 = arith.constant 4.000000e+00 : f32
      %214 = vector.broadcast %cst_118 : f32 to vector<1x128xf32>
      %215 = arith.mulf %214, %94 : vector<1x128xf32>
      %216 = arith.mulf %215, %212 : vector<1x128xf32>
      %217 = arith.addf %213, %216 : vector<1x128xf32>
      %cst_119 = arith.constant 6.000000e+00 : f32
      %218 = vector.broadcast %cst_119 : f32 to vector<1x128xf32>
      %219 = arith.mulf %218, %97 : vector<1x128xf32>
      %220 = arith.mulf %219, %211 : vector<1x128xf32>
      %221 = arith.addf %217, %220 : vector<1x128xf32>
      %cst_120 = arith.constant 4.000000e+00 : f32
      %222 = vector.broadcast %cst_120 : f32 to vector<1x128xf32>
      %223 = arith.mulf %222, %100 : vector<1x128xf32>
      %224 = arith.mulf %223, %210 : vector<1x128xf32>
      %225 = arith.addf %221, %224 : vector<1x128xf32>
      %cst_121 = arith.constant 1.000000e+00 : f32
      %226 = vector.broadcast %cst_121 : f32 to vector<1x128xf32>
      %227 = arith.mulf %226, %103 : vector<1x128xf32>
      %228 = arith.mulf %227, %209 : vector<1x128xf32>
      %229 = arith.addf %225, %228 : vector<1x128xf32>
      %cst_122 = arith.constant 0.000000e+00 : f32
      %230 = vector.broadcast %cst_122 : f32 to vector<1x128xf32>
      %231 = arith.subf %230, %109 : vector<1x128xf32>
      %cst_123 = arith.constant 1.000000e+00 : f32
      %232 = vector.broadcast %cst_123 : f32 to vector<1x128xf32>
      %233 = arith.mulf %232, %231 : vector<1x128xf32>
      %234 = arith.mulf %233, %231 : vector<1x128xf32>
      %235 = arith.mulf %234, %231 : vector<1x128xf32>
      %236 = arith.mulf %235, %231 : vector<1x128xf32>
      %cst_124 = arith.constant 4.000000e+00 : f32
      %237 = vector.broadcast %cst_124 : f32 to vector<1x128xf32>
      %238 = arith.mulf %237, %109 : vector<1x128xf32>
      %239 = arith.mulf %238, %235 : vector<1x128xf32>
      %240 = arith.addf %236, %239 : vector<1x128xf32>
      %cst_125 = arith.constant 6.000000e+00 : f32
      %241 = vector.broadcast %cst_125 : f32 to vector<1x128xf32>
      %242 = arith.mulf %241, %112 : vector<1x128xf32>
      %243 = arith.mulf %242, %234 : vector<1x128xf32>
      %244 = arith.addf %240, %243 : vector<1x128xf32>
      %cst_126 = arith.constant 4.000000e+00 : f32
      %245 = vector.broadcast %cst_126 : f32 to vector<1x128xf32>
      %246 = arith.mulf %245, %115 : vector<1x128xf32>
      %247 = arith.mulf %246, %233 : vector<1x128xf32>
      %248 = arith.addf %244, %247 : vector<1x128xf32>
      %cst_127 = arith.constant 1.000000e+00 : f32
      %249 = vector.broadcast %cst_127 : f32 to vector<1x128xf32>
      %250 = arith.mulf %249, %118 : vector<1x128xf32>
      %251 = arith.mulf %250, %232 : vector<1x128xf32>
      %252 = arith.addf %248, %251 : vector<1x128xf32>
      %253 = arith.subf %229, %252 : vector<1x128xf32>
      %254 = arith.mulf %253, %253 : vector<1x128xf32>
      %255 = vector.shape_cast %254 : vector<1x128xf32> to vector<1x1x128xf32>
      %cst_128 = arith.constant dense<0.000000e+00> : vector<1xf32>
      %256 = vector.multi_reduction <add>, %255, %cst_128 [1, 2] : vector<1x1x128xf32> to vector<1xf32>
      %257 = vector.shape_cast %256 : vector<1xf32> to vector<1x1x1xf32>
      %258 = vector.extract %257[0, 0, 0] : f32 from vector<1x1x1xf32>
      %259 = math.sqrt %258 : f32
      %260 = arith.addf %206, %259 : f32
      %cst_129 = arith.constant 0.000000e+00 : f32
      %261 = vector.broadcast %cst_129 : f32 to vector<1x128xf32>
      %262 = arith.subf %261, %94 : vector<1x128xf32>
      %cst_130 = arith.constant 1.000000e+00 : f32
      %263 = vector.broadcast %cst_130 : f32 to vector<1x128xf32>
      %264 = arith.mulf %263, %262 : vector<1x128xf32>
      %265 = arith.mulf %264, %262 : vector<1x128xf32>
      %266 = arith.mulf %265, %262 : vector<1x128xf32>
      %267 = arith.mulf %266, %262 : vector<1x128xf32>
      %268 = arith.mulf %267, %262 : vector<1x128xf32>
      %cst_131 = arith.constant 5.000000e+00 : f32
      %269 = vector.broadcast %cst_131 : f32 to vector<1x128xf32>
      %270 = arith.mulf %269, %94 : vector<1x128xf32>
      %271 = arith.mulf %270, %267 : vector<1x128xf32>
      %272 = arith.addf %268, %271 : vector<1x128xf32>
      %cst_132 = arith.constant 1.000000e+01 : f32
      %273 = vector.broadcast %cst_132 : f32 to vector<1x128xf32>
      %274 = arith.mulf %273, %97 : vector<1x128xf32>
      %275 = arith.mulf %274, %266 : vector<1x128xf32>
      %276 = arith.addf %272, %275 : vector<1x128xf32>
      %cst_133 = arith.constant 1.000000e+01 : f32
      %277 = vector.broadcast %cst_133 : f32 to vector<1x128xf32>
      %278 = arith.mulf %277, %100 : vector<1x128xf32>
      %279 = arith.mulf %278, %265 : vector<1x128xf32>
      %280 = arith.addf %276, %279 : vector<1x128xf32>
      %cst_134 = arith.constant 5.000000e+00 : f32
      %281 = vector.broadcast %cst_134 : f32 to vector<1x128xf32>
      %282 = arith.mulf %281, %103 : vector<1x128xf32>
      %283 = arith.mulf %282, %264 : vector<1x128xf32>
      %284 = arith.addf %280, %283 : vector<1x128xf32>
      %cst_135 = arith.constant 1.000000e+00 : f32
      %285 = vector.broadcast %cst_135 : f32 to vector<1x128xf32>
      %286 = arith.mulf %285, %106 : vector<1x128xf32>
      %287 = arith.mulf %286, %263 : vector<1x128xf32>
      %288 = arith.addf %284, %287 : vector<1x128xf32>
      %cst_136 = arith.constant 0.000000e+00 : f32
      %289 = vector.broadcast %cst_136 : f32 to vector<1x128xf32>
      %290 = arith.subf %289, %109 : vector<1x128xf32>
      %cst_137 = arith.constant 1.000000e+00 : f32
      %291 = vector.broadcast %cst_137 : f32 to vector<1x128xf32>
      %292 = arith.mulf %291, %290 : vector<1x128xf32>
      %293 = arith.mulf %292, %290 : vector<1x128xf32>
      %294 = arith.mulf %293, %290 : vector<1x128xf32>
      %295 = arith.mulf %294, %290 : vector<1x128xf32>
      %296 = arith.mulf %295, %290 : vector<1x128xf32>
      %cst_138 = arith.constant 5.000000e+00 : f32
      %297 = vector.broadcast %cst_138 : f32 to vector<1x128xf32>
      %298 = arith.mulf %297, %109 : vector<1x128xf32>
      %299 = arith.mulf %298, %295 : vector<1x128xf32>
      %300 = arith.addf %296, %299 : vector<1x128xf32>
      %cst_139 = arith.constant 1.000000e+01 : f32
      %301 = vector.broadcast %cst_139 : f32 to vector<1x128xf32>
      %302 = arith.mulf %301, %112 : vector<1x128xf32>
      %303 = arith.mulf %302, %294 : vector<1x128xf32>
      %304 = arith.addf %300, %303 : vector<1x128xf32>
      %cst_140 = arith.constant 1.000000e+01 : f32
      %305 = vector.broadcast %cst_140 : f32 to vector<1x128xf32>
      %306 = arith.mulf %305, %115 : vector<1x128xf32>
      %307 = arith.mulf %306, %293 : vector<1x128xf32>
      %308 = arith.addf %304, %307 : vector<1x128xf32>
      %cst_141 = arith.constant 5.000000e+00 : f32
      %309 = vector.broadcast %cst_141 : f32 to vector<1x128xf32>
      %310 = arith.mulf %309, %118 : vector<1x128xf32>
      %311 = arith.mulf %310, %292 : vector<1x128xf32>
      %312 = arith.addf %308, %311 : vector<1x128xf32>
      %cst_142 = arith.constant 1.000000e+00 : f32
      %313 = vector.broadcast %cst_142 : f32 to vector<1x128xf32>
      %314 = arith.mulf %313, %121 : vector<1x128xf32>
      %315 = arith.mulf %314, %291 : vector<1x128xf32>
      %316 = arith.addf %312, %315 : vector<1x128xf32>
      %317 = arith.subf %288, %316 : vector<1x128xf32>
      %318 = arith.mulf %317, %317 : vector<1x128xf32>
      %319 = vector.shape_cast %318 : vector<1x128xf32> to vector<1x1x128xf32>
      %cst_143 = arith.constant dense<0.000000e+00> : vector<1xf32>
      %320 = vector.multi_reduction <add>, %319, %cst_143 [1, 2] : vector<1x1x128xf32> to vector<1xf32>
      %321 = vector.shape_cast %320 : vector<1xf32> to vector<1x1x1xf32>
      %322 = vector.extract %321[0, 0, 0] : f32 from vector<1x1x1xf32>
      %323 = math.sqrt %322 : f32
      %324 = arith.addf %260, %323 : f32
      %325 = vector.broadcast %324 : f32 to vector<1x1xf32>
      %c0_144 = arith.constant 0 : index
      %c0_145 = arith.constant 0 : index
      %326 = vector.load %arg7[%c0_144, %c0_145] : memref<1x1xf32, #tpu.memory_space<vmem>>, vector<1x1xf32>
      tpu.vector_store %arg7[%c0_144, %c0_145], %325 {strides = array<i32>} : memref<1x1xf32, #tpu.memory_space<vmem>>, vector<1x1xf32>,
    } else {
    }
    return
  }
  func.func @transform_0(%arg0: i32) -> (i32, i32) {
    %c0_i32 = arith.constant 0 : i32
    %c0_i32_0 = arith.constant 0 : i32
    return %arg0, %c0_i32 : i32, i32
  }
  func.func @transform_1(%arg0: i32) -> (i32, i32) {
    %c0_i32 = arith.constant 0 : i32
    %c0_i32_0 = arith.constant 0 : i32
    return %arg0, %c0_i32 : i32, i32
  }
  func.func @transform_2(%arg0: i32) -> (i32, i32) {
    %c0_i32 = arith.constant 0 : i32
    %c0_i32_0 = arith.constant 0 : i32
    %c0_i32_1 = arith.constant 0 : i32
    return %c0_i32, %c0_i32_0 : i32, i32
  }
  func.func @transform_3(%arg0: i32) -> (i32, i32) {
    %c0_i32 = arith.constant 0 : i32
    %c0_i32_0 = arith.constant 0 : i32
    %c0_i32_1 = arith.constant 0 : i32
    return %c0_i32, %c0_i32_0 : i32, i32
  }
  func.func @transform_4(%arg0: i32) -> (i32, i32) {
    %c0_i32 = arith.constant 0 : i32
    %c0_i32_0 = arith.constant 0 : i32
    %c0_i32_1 = arith.constant 0 : i32
    return %c0_i32, %c0_i32_0 : i32, i32
  }
  func.func @transform_5(%arg0: i32) -> (i32, i32) {
    %c0_i32 = arith.constant 0 : i32
    %c0_i32_0 = arith.constant 0 : i32
    %c0_i32_1 = arith.constant 0 : i32
    return %c0_i32, %c0_i32_0 : i32, i32
  }
  func.func @transform_6(%arg0: i32) -> (i32, i32) {
    %c0_i32 = arith.constant 0 : i32
    %c0_i32_0 = arith.constant 0 : i32
    %c0_i32_1 = arith.constant 0 : i32
    return %c0_i32, %c0_i32_0 : i32, i32
  }
}

</mosaic_0001>

<llo_original>
// kernel: sim_loss.1
$region0: #{sim_loss.1}
  #allocation0 [shape = 'u32[]', space=smem, size = 0x4, offset = 0x4, fixed_abs, tag = 'smem constant byte address 0x4 - core index']
  #allocation1 [shape = 'u32[144,128]{1,0:T(1,128)}', space=vmem, size = 0x12000, scoped, tag = 'internal scratch']
  #allocation2 [shape = 'f32[5,128]{1,0:T(8,128)}', space=vmem, size = 0x1000, scoped, tag = 'scratch operand']
  #allocation3 [shape = 'f32[5,128]{1,0:T(8,128)}', space=vmem, size = 0x1000, scoped, tag = 'scratch operand']
  %s0 = inlined_call_operand.vmem [shape: f32[8,128], index: 0, kind: input, shape index: {}]
  %s1 = inlined_call_operand.vmem [shape: f32[8,128], index: 1, kind: input, shape index: {}]
  %s2 = inlined_call_operand.vmem [shape: f32[128,128], index: 2, kind: input, shape index: {}]
  %s3 = inlined_call_operand.vmem [shape: f32[1,128], index: 3, kind: input, shape index: {}]
  %s4 = inlined_call_operand.vmem [shape: f32[128,128], index: 4, kind: input, shape index: {}]
  %s5 = inlined_call_operand.vmem [shape: f32[1,128], index: 5, kind: input, shape index: {}]
  %s6 = inlined_call_operand.hbm [shape: f32[1,1], index: 6, kind: output, shape index: {}]
  %s7 = sld [smem:[#allocation0]]
  $region42: #{sim_loss.1} parent=0
    _
  %s9 = ssub.s32 1, %s7
  %s10 = scalar_select 0, %s9, %s7
  $region1: #{sim_loss.1} parent=0
    #allocation4 [shape = 'u8[512]{0}', space=vmem, size = 0x400, scoped, tag = 'output window, operand 0, single buffered']
    #allocation5 [shape = 's32[1]{0}', space=sflag, size = 0x4, scoped, tag = 'scoped memory for sim_loss.1']
    %11 = vsyncpa [#allocation5], 0
    // Predicated region
    $region2: #{sim_loss.1} parent=1 // pred_check
      _
    $region3: #{sim_loss.1} parent=1 // pred_check_branch
      %13 = sbr.rel (0) target = $region5
    $region4: #{sim_loss.1} parent=1 // pred_region
      _
    $region5: #{sim_loss.1} parent=1 // pred_fallthru
      _
    // Predicated region
    $region6: #{sim_loss.1} parent=1 // pred_check
      _
    $region7: #{sim_loss.1} parent=1 // pred_check_branch
      %15 = sbr.rel (0) target = $region9
    $region8: #{sim_loss.1} parent=1 // pred_region
      _
    $region9: #{sim_loss.1} parent=1 // pred_fallthru
      _
    // Predicated region
    $region10: #{sim_loss.1} parent=1 // pred_check
      _
    $region11: #{sim_loss.1} parent=1 // pred_check_branch
      %17 = sbr.rel (0) target = $region13
    $region12: #{sim_loss.1} parent=1 // pred_region
      _
    $region13: #{sim_loss.1} parent=1 // pred_fallthru
      _
    // Predicated region
    $region14: #{sim_loss.1} parent=1 // pred_check
      _
    $region15: #{sim_loss.1} parent=1 // pred_check_branch
      %19 = sbr.rel (0) target = $region17
    $region16: #{sim_loss.1} parent=1 // pred_region
      _
    $region17: #{sim_loss.1} parent=1 // pred_fallthru
      _
    // Predicated region
    $region18: #{sim_loss.1} parent=1 // pred_check
      _
    $region19: #{sim_loss.1} parent=1 // pred_check_branch
      %21 = sbr.rel (0) target = $region21
    $region20: #{sim_loss.1} parent=1 // pred_region
      _
    $region21: #{sim_loss.1} parent=1 // pred_fallthru
      _
    // Predicated region
    $region22: #{sim_loss.1} parent=1 // pred_check
      _
    $region23: #{sim_loss.1} parent=1 // pred_check_branch
      %23 = sbr.rel (0) target = $region25
    $region24: #{sim_loss.1} parent=1 // pred_region
      _
    $region25: #{sim_loss.1} parent=1 // pred_fallthru
      _
    %p24 = scmp.eq.s32.totalorder 0, 0
    // Predicated region
    $region26: #{sim_loss.1} parent=1 // pred_check
      %p25 = pneg %p24
    $region27: #{sim_loss.1} parent=1 // pred_check_branch
      %27 = sbr.rel (%p25) target = $region29
    $region28: #{sim_loss.1} parent=1 // pred_region
      %28 = vst [vmem:[#allocation2] sm:$0x1f] 0.0
      %29 = vst [vmem:[#allocation3] sm:$0x1f] 0.0
    $region29: #{sim_loss.1} parent=1 // pred_fallthru
      _
    %v30 = vld [vmem:[%s0] sm:$0xff]
    %v31 = vld [vmem:[%s2] sm:$0xff]
    %v32 = vld [vmem:[%s2 + $0x8] sm:$0xff]
    %v33 = vld [vmem:[%s2 + $0x10] sm:$0xff]
    %v34 = vld [vmem:[%s2 + $0x18] sm:$0xff]
    %v35 = vld [vmem:[%s2 + $0x20] sm:$0xff]
    %v36 = vld [vmem:[%s2 + $0x28] sm:$0xff]
    %v37 = vld [vmem:[%s2 + $0x30] sm:$0xff]
    %v38 = vld [vmem:[%s2 + $0x38] sm:$0xff]
    %v39 = vld [vmem:[%s2 + $0x40] sm:$0xff]
    %v40 = vld [vmem:[%s2 + $0x48] sm:$0xff]
    %v41 = vld [vmem:[%s2 + $0x50] sm:$0xff]
    %v42 = vld [vmem:[%s2 + $0x58] sm:$0xff]
    %v43 = vld [vmem:[%s2 + $0x60] sm:$0xff]
    %v44 = vld [vmem:[%s2 + $0x68] sm:$0xff]
    %v45 = vld [vmem:[%s2 + $0x70] sm:$0xff]
    %v46 = vld [vmem:[%s2 + $0x78] sm:$0xff]
    %v47 = vld [vmem:[%s3] sm:$0x1]
    %v49 = vlaneseq
    %v50 = vshrl.u32 %v49, 7
    %v51 = vsub.s32 0, %v50
    %v52 = vrot.slane %v47, %v51
    %54 = vmatprep.subr.mxu0 0.0
    %v55 = vand.u32 %v31, 4294901760
    %56 = vmatpush1.msra.mxu0 %v55
    %57 = vmatprep.subr.mxu0 0.0
    %v58 = vand.u32 %v32, 4294901760
    %59 = vmatpush1.msra.mxu0 %v58
    %60 = vmatprep.subr.mxu0 0.0
    %v61 = vand.u32 %v33, 4294901760
    %62 = vmatpush1.msra.mxu0 %v61
    %63 = vmatprep.subr.mxu0 0.0
    %v64 = vand.u32 %v34, 4294901760
    %65 = vmatpush1.msra.mxu0 %v64
    %66 = vmatprep.subr.mxu0 0.0
    %v67 = vand.u32 %v35, 4294901760
    %68 = vmatpush1.msra.mxu0 %v67
    %69 = vmatprep.subr.mxu0 0.0
    %v70 = vand.u32 %v36, 4294901760
    %71 = vmatpush1.msra.mxu0 %v70
    %72 = vmatprep.subr.mxu0 0.0
    %v73 = vand.u32 %v37, 4294901760
    %74 = vmatpush1.msra.mxu0 %v73
    %75 = vmatprep.subr.mxu0 0.0
    %v76 = vand.u32 %v38, 4294901760
    %77 = vmatpush1.msra.mxu0 %v76
    %78 = vmatprep.subr.mxu0 0.0
    %v79 = vand.u32 %v39, 4294901760
    %80 = vmatpush1.msra.mxu0 %v79
    %81 = vmatprep.subr.mxu0 0.0
    %v82 = vand.u32 %v40, 4294901760
    %83 = vmatpush1.msra.mxu0 %v82
    %84 = vmatprep.subr.mxu0 0.0
    %v85 = vand.u32 %v41, 4294901760
    %86 = vmatpush1.msra.mxu0 %v85
    %87 = vmatprep.subr.mxu0 0.0
    %v88 = vand.u32 %v42, 4294901760
    %89 = vmatpush1.msra.mxu0 %v88
    %90 = vmatprep.subr.mxu0 0.0
    %v91 = vand.u32 %v43, 4294901760
    %92 = vmatpush1.msra.mxu0 %v91
    %93 = vmatprep.subr.mxu0 0.0
    %v94 = vand.u32 %v44, 4294901760
    %95 = vmatpush1.msra.mxu0 %v94
    %96 = vmatprep.subr.mxu0 0.0
    %v97 = vand.u32 %v45, 4294901760
    %98 = vmatpush1.msra.mxu0 %v97
    %99 = vmatprep.subr.mxu0 0.0
    %v100 = vand.u32 %v46, 4294901760
    %101 = vmatpush1.msra.mxu0 %v100
    %102 = vmatprep.subr.mxu0 0.0
    %103 = vmatpush1.msra.mxu0 0.0
    %104 = vmatprep.subr.mxu0 0.0
    %105 = vmatpush1.msra.mxu0 0.0
    %106 = vmatprep.subr.mxu0 0.0
    %107 = vmatpush1.msra.mxu0 0.0
    %108 = vmatprep.subr.mxu0 0.0
    %109 = vmatpush1.msra.mxu0 0.0
    %110 = vmatprep.subr.mxu0 0.0
    %111 = vmatpush1.msra.mxu0 0.0
    %112 = vmatprep.subr.mxu0 0.0
    %113 = vmatpush1.msra.mxu0 0.0
    %114 = vmatprep.subr.mxu0 0.0
    %115 = vmatpush1.msra.mxu0 0.0
    %116 = vmatprep.subr.mxu0 0.0
    %117 = vmatpush1.msra.mxu0 0.0
    %118 = vmatprep.subr.mxu0 0.0
    %119 = vmatpush1.msra.mxu0 0.0
    %120 = vmatprep.subr.mxu0 0.0
    %121 = vmatpush1.msra.mxu0 0.0
    %122 = vmatprep.subr.mxu0 0.0
    %123 = vmatpush1.msra.mxu0 0.0
    %124 = vmatprep.subr.mxu0 0.0
    %125 = vmatpush1.msra.mxu0 0.0
    %126 = vmatprep.subr.mxu0 0.0
    %127 = vmatpush1.msra.mxu0 0.0
    %128 = vmatprep.subr.mxu0 0.0
    %129 = vmatpush1.msra.mxu0 0.0
    %130 = vmatprep.subr.mxu0 0.0
    %131 = vmatpush1.msra.mxu0 0.0
    %132 = vmatprep.subr.mxu0 0.0
    %133 = vmatpush1.msra.mxu0 0.0
    %134 = vmatprep.mubr.f32.mxu0 0.0
    %v135 = vand.u32 %v30, 4294901760
    %v136 = vsub.f32 %v30, %v135
    %v137 = vand.u32 %v136, 4294901760
    %v138 = vsub.f32 %v136, %v137
    %v139 = vand.u32 %v138, 4294901760
    %140 = vmatmul.mubr.f32.gmra.mrb[0].mxu0 %v139
    %v141 = vpop.f32.mrb[0].mxu0
    %v142 = vadd.f32 %v52, %v141
    %v143 = vpop.f32.mrb[0].mxu0
    %144 = vdwg.mxu0
    %145 = vmatprep.subr.mxu0 0.0
    %v146 = vand.u32 %v31, 4294901760
    %v147 = vsub.f32 %v31, %v146
    %v148 = vand.u32 %v147, 4294901760
    %v149 = vsub.f32 %v147, %v148
    %v150 = vand.u32 %v149, 4294901760
    %151 = vmatpush1.msra.mxu0 %v150
    %152 = vmatprep.subr.mxu0 0.0
    %v153 = vand.u32 %v32, 4294901760
    %v154 = vsub.f32 %v32, %v153
    %v155 = vand.u32 %v154, 4294901760
    %v156 = vsub.f32 %v154, %v155
    %v157 = vand.u32 %v156, 4294901760
    %158 = vmatpush1.msra.mxu0 %v157
    %159 = vmatprep.subr.mxu0 0.0
    %v160 = vand.u32 %v33, 4294901760
    %v161 = vsub.f32 %v33, %v160
    %v162 = vand.u32 %v161, 4294901760
    %v163 = vsub.f32 %v161, %v162
    %v164 = vand.u32 %v163, 4294901760
    %165 = vmatpush1.msra.mxu0 %v164
    %166 = vmatprep.subr.mxu0 0.0
    %v167 = vand.u32 %v34, 4294901760
    %v168 = vsub.f32 %v34, %v167
    %v169 = vand.u32 %v168, 4294901760
    %v170 = vsub.f32 %v168, %v169
    %v171 = vand.u32 %v170, 4294901760
    %172 = vmatpush1.msra.mxu0 %v171
    %173 = vmatprep.subr.mxu0 0.0
    %v174 = vand.u32 %v35, 4294901760
    %v175 = vsub.f32 %v35, %v174
    %v176 = vand.u32 %v175, 4294901760
    %v177 = vsub.f32 %v175, %v176
    %v178 = vand.u32 %v177, 4294901760
    %179 = vmatpush1.msra.mxu0 %v178
    %180 = vmatprep.subr.mxu0 0.0
    %v181 = vand.u32 %v36, 4294901760
    %v182 = vsub.f32 %v36, %v181
    %v183 = vand.u32 %v182, 4294901760
    %v184 = vsub.f32 %v182, %v183
    %v185 = vand.u32 %v184, 4294901760
    %186 = vmatpush1.msra.mxu0 %v185
    %187 = vmatprep.subr.mxu0 0.0
    %v188 = vand.u32 %v37, 4294901760
    %v189 = vsub.f32 %v37, %v188
    %v190 = vand.u32 %v189, 4294901760
    %v191 = vsub.f32 %v189, %v190
    %v192 = vand.u32 %v191, 4294901760
    %193 = vmatpush1.msra.mxu0 %v192
    %194 = vmatprep.subr.mxu0 0.0
    %v195 = vand.u32 %v38, 4294901760
    %v196 = vsub.f32 %v38, %v195
    %v197 = vand.u32 %v196, 4294901760
    %v198 = vsub.f32 %v196, %v197
    %v199 = vand.u32 %v198, 4294901760
    %200 = vmatpush1.msra.mxu0 %v199
    %201 = vmatprep.subr.mxu0 0.0
    %v202 = vand.u32 %v39, 4294901760
    %v203 = vsub.f32 %v39, %v202
    %v204 = vand.u32 %v203, 4294901760
    %v205 = vsub.f32 %v203, %v204
    %v206 = vand.u32 %v205, 4294901760
    %207 = vmatpush1.msra.mxu0 %v206
    %208 = vmatprep.subr.mxu0 0.0
    %v209 = vand.u32 %v40, 4294901760
    %v210 = vsub.f32 %v40, %v209
    %v211 = vand.u32 %v210, 4294901760
    %v212 = vsub.f32 %v210, %v211
    %v213 = vand.u32 %v212, 4294901760
    %214 = vmatpush1.msra.mxu0 %v213
    %215 = vmatprep.subr.mxu0 0.0
    %v216 = vand.u32 %v41, 4294901760
    %v217 = vsub.f32 %v41, %v216
    %v218 = vand.u32 %v217, 4294901760
    %v219 = vsub.f32 %v217, %v218
    %v220 = vand.u32 %v219, 4294901760
    %221 = vmatpush1.msra.mxu0 %v220
    %222 = vmatprep.subr.mxu0 0.0
    %v223 = vand.u32 %v42, 4294901760
    %v224 = vsub.f32 %v42, %v223
    %v225 = vand.u32 %v224, 4294901760
    %v226 = vsub.f32 %v224, %v225
    %v227 = vand.u32 %v226, 4294901760
    %228 = vmatpush1.msra.mxu0 %v227
    %229 = vmatprep.subr.mxu0 0.0
    %v230 = vand.u32 %v43, 4294901760
    %v231 = vsub.f32 %v43, %v230
    %v232 = vand.u32 %v231, 4294901760
    %v233 = vsub.f32 %v231, %v232
    %v234 = vand.u32 %v233, 4294901760
    %235 = vmatpush1.msra.mxu0 %v234
    %236 = vmatprep.subr.mxu0 0.0
    %v237 = vand.u32 %v44, 4294901760
    %v238 = vsub.f32 %v44, %v237
    %v239 = vand.u32 %v238, 4294901760
    %v240 = vsub.f32 %v238, %v239
    %v241 = vand.u32 %v240, 4294901760
    %242 = vmatpush1.msra.mxu0 %v241
    %243 = vmatprep.subr.mxu0 0.0
    %v244 = vand.u32 %v45, 4294901760
    %v245 = vsub.f32 %v45, %v244
    %v246 = vand.u32 %v245, 4294901760
    %v247 = vsub.f32 %v245, %v246
    %v248 = vand.u32 %v247, 4294901760
    %249 = vmatpush1.msra.mxu0 %v248
    %250 = vmatprep.subr.mxu0 0.0
    %v251 = vand.u32 %v46, 4294901760
    %v252 = vsub.f32 %v46, %v251
    %v253 = vand.u32 %v252, 4294901760
    %v254 = vsub.f32 %v252, %v253
    %v255 = vand.u32 %v254, 4294901760
    %256 = vmatpush1.msra.mxu0 %v255
    %257 = vmatprep.subr.mxu0 0.0
    %258 = vmatpush1.msra.mxu0 0.0
    %259 = vmatprep.subr.mxu0 0.0
    %260 = vmatpush1.msra.mxu0 0.0
    %261 = vmatprep.subr.mxu0 0.0
    %262 = vmatpush1.msra.mxu0 0.0
    %263 = vmatprep.subr.mxu0 0.0
    %264 = vmatpush1.msra.mxu0 0.0
    %265 = vmatprep.subr.mxu0 0.0
    %266 = vmatpush1.msra.mxu0 0.0
    %267 = vmatprep.subr.mxu0 0.0
    %268 = vmatpush1.msra.mxu0 0.0
    %269 = vmatprep.subr.mxu0 0.0
    %270 = vmatpush1.msra.mxu0 0.0
    %271 = vmatprep.subr.mxu0 0.0
    %272 = vmatpush1.msra.mxu0 0.0
    %273 = vmatprep.subr.mxu0 0.0
    %274 = vmatpush1.msra.mxu0 0.0
    %275 = vmatprep.subr.mxu0 0.0
    %276 = vmatpush1.msra.mxu0 0.0
    %277 = vmatprep.subr.mxu0 0.0
    %278 = vmatpush1.msra.mxu0 0.0
    %279 = vmatprep.subr.mxu0 0.0
    %280 = vmatpush1.msra.mxu0 0.0
    %281 = vmatprep.subr.mxu0 0.0
    %282 = vmatpush1.msra.mxu0 0.0
    %283 = vmatprep.subr.mxu0 0.0
    %284 = vmatpush1.msra.mxu0 0.0
    %285 = vmatprep.subr.mxu0 0.0
    %286 = vmatpush1.msra.mxu0 0.0
    %287 = vmatprep.subr.mxu0 0.0
    %288 = vmatpush1.msra.mxu0 0.0
    %289 = vmatprep.mubr.f32.mxu0 0.0
    %v290 = vand.u32 %v30, 4294901760
    %291 = vmatmul.mubr.f32.gmra.mrb[0].mxu0 %v290
    %v292 = vpop.f32.mrb[0].mxu0
    %v293 = vadd.f32 %v142, %v292
    %v294 = vpop.f32.mrb[0].mxu0
    %295 = vdwg.mxu0
    %296 = vmatprep.subr.mxu0 0.0
    %v297 = vand.u32 %v31, 4294901760
    %v298 = vsub.f32 %v31, %v297
    %299 = vmatpush1.msra.mxu0 %v298
    %300 = vmatprep.subr.mxu0 0.0
    %v301 = vand.u32 %v32, 4294901760
    %v302 = vsub.f32 %v32, %v301
    %303 = vmatpush1.msra.mxu0 %v302
    %304 = vmatprep.subr.mxu0 0.0
    %v305 = vand.u32 %v33, 4294901760
    %v306 = vsub.f32 %v33, %v305
    %307 = vmatpush1.msra.mxu0 %v306
    %308 = vmatprep.subr.mxu0 0.0
    %v309 = vand.u32 %v34, 4294901760
    %v310 = vsub.f32 %v34, %v309
    %311 = vmatpush1.msra.mxu0 %v310
    %312 = vmatprep.subr.mxu0 0.0
    %v313 = vand.u32 %v35, 4294901760
    %v314 = vsub.f32 %v35, %v313
    %315 = vmatpush1.msra.mxu0 %v314
    %316 = vmatprep.subr.mxu0 0.0
    %v317 = vand.u32 %v36, 4294901760
    %v318 = vsub.f32 %v36, %v317
    %319 = vmatpush1.msra.mxu0 %v318
    %320 = vmatprep.subr.mxu0 0.0
    %v321 = vand.u32 %v37, 4294901760
    %v322 = vsub.f32 %v37, %v321
    %323 = vmatpush1.msra.mxu0 %v322
    %324 = vmatprep.subr.mxu0 0.0
    %v325 = vand.u32 %v38, 4294901760
    %v326 = vsub.f32 %v38, %v325
    %327 = vmatpush1.msra.mxu0 %v326
    %328 = vmatprep.subr.mxu0 0.0
    %v329 = vand.u32 %v39, 4294901760
    %v330 = vsub.f32 %v39, %v329
    %331 = vmatpush1.msra.mxu0 %v330
    %332 = vmatprep.subr.mxu0 0.0
    %v333 = vand.u32 %v40, 4294901760
    %v334 = vsub.f32 %v40, %v333
    %335 = vmatpush1.msra.mxu0 %v334
    %336 = vmatprep.subr.mxu0 0.0
    %v337 = vand.u32 %v41, 4294901760
    %v338 = vsub.f32 %v41, %v337
    %339 = vmatpush1.msra.mxu0 %v338
    %340 = vmatprep.subr.mxu0 0.0
    %v341 = vand.u32 %v42, 4294901760
    %v342 = vsub.f32 %v42, %v341
    %343 = vmatpush1.msra.mxu0 %v342
    %344 = vmatprep.subr.mxu0 0.0
    %v345 = vand.u32 %v43, 4294901760
    %v346 = vsub.f32 %v43, %v345
    %347 = vmatpush1.msra.mxu0 %v346
    %348 = vmatprep.subr.mxu0 0.0
    %v349 = vand.u32 %v44, 4294901760
    %v350 = vsub.f32 %v44, %v349
    %351 = vmatpush1.msra.mxu0 %v350
    %352 = vmatprep.subr.mxu0 0.0
    %v353 = vand.u32 %v45, 4294901760
    %v354 = vsub.f32 %v45, %v353
    %355 = vmatpush1.msra.mxu0 %v354
    %356 = vmatprep.subr.mxu0 0.0
    %v357 = vand.u32 %v46, 4294901760
    %v358 = vsub.f32 %v46, %v357
    %359 = vmatpush1.msra.mxu0 %v358
    %360 = vmatprep.subr.mxu0 0.0
    %361 = vmatpush1.msra.mxu0 0.0
    %362 = vmatprep.subr.mxu0 0.0
    %363 = vmatpush1.msra.mxu0 0.0
    %364 = vmatprep.subr.mxu0 0.0
    %365 = vmatpush1.msra.mxu0 0.0
    %366 = vmatprep.subr.mxu0 0.0
    %367 = vmatpush1.msra.mxu0 0.0
    %368 = vmatprep.subr.mxu0 0.0
    %369 = vmatpush1.msra.mxu0 0.0
    %370 = vmatprep.subr.mxu0 0.0
    %371 = vmatpush1.msra.mxu0 0.0
    %372 = vmatprep.subr.mxu0 0.0
    %373 = vmatpush1.msra.mxu0 0.0
    %374 = vmatprep.subr.mxu0 0.0
    %375 = vmatpush1.msra.mxu0 0.0
    %376 = vmatprep.subr.mxu0 0.0
    %377 = vmatpush1.msra.mxu0 0.0
    %378 = vmatprep.subr.mxu0 0.0
    %379 = vmatpush1.msra.mxu0 0.0
    %380 = vmatprep.subr.mxu0 0.0
    %381 = vmatpush1.msra.mxu0 0.0
    %382 = vmatprep.subr.mxu0 0.0
    %383 = vmatpush1.msra.mxu0 0.0
    %384 = vmatprep.subr.mxu0 0.0
    %385 = vmatpush1.msra.mxu0 0.0
    %386 = vmatprep.subr.mxu0 0.0
    %387 = vmatpush1.msra.mxu0 0.0
    %388 = vmatprep.subr.mxu0 0.0
    %389 = vmatpush1.msra.mxu0 0.0
    %390 = vmatprep.subr.mxu0 0.0
    %391 = vmatpush1.msra.mxu0 0.0
    %392 = vmatprep.mubr.f32.mxu0 0.0
    %v393 = vand.u32 %v30, 4294901760
    %v394 = vsub.f32 %v30, %v393
    %395 = vmatmul.mubr.f32.gmra.mrb[0].mxu0 %v394
    %v396 = vpop.f32.mrb[0].mxu0
    %v397 = vadd.f32 %v293, %v396
    %v398 = vpop.f32.mrb[0].mxu0
    %399 = vdwg.mxu0
    %400 = vmatprep.subr.mxu0 0.0
    %v401 = vand.u32 %v31, 4294901760
    %402 = vmatpush1.msra.mxu0 %v401
    %403 = vmatprep.subr.mxu0 0.0
    %v404 = vand.u32 %v32, 4294901760
    %405 = vmatpush1.msra.mxu0 %v404
    %406 = vmatprep.subr.mxu0 0.0
    %v407 = vand.u32 %v33, 4294901760
    %408 = vmatpush1.msra.mxu0 %v407
    %409 = vmatprep.subr.mxu0 0.0
    %v410 = vand.u32 %v34, 4294901760
    %411 = vmatpush1.msra.mxu0 %v410
    %412 = vmatprep.subr.mxu0 0.0
    %v413 = vand.u32 %v35, 4294901760
    %414 = vmatpush1.msra.mxu0 %v413
    %415 = vmatprep.subr.mxu0 0.0
    %v416 = vand.u32 %v36, 4294901760
    %417 = vmatpush1.msra.mxu0 %v416
    %418 = vmatprep.subr.mxu0 0.0
    %v419 = vand.u32 %v37, 4294901760
    %420 = vmatpush1.msra.mxu0 %v419
    %421 = vmatprep.subr.mxu0 0.0
    %v422 = vand.u32 %v38, 4294901760
    %423 = vmatpush1.msra.mxu0 %v422
    %424 = vmatprep.subr.mxu0 0.0
    %v425 = vand.u32 %v39, 4294901760
    %426 = vmatpush1.msra.mxu0 %v425
    %427 = vmatprep.subr.mxu0 0.0
    %v428 = vand.u32 %v40, 4294901760
    %429 = vmatpush1.msra.mxu0 %v428
    %430 = vmatprep.subr.mxu0 0.0
    %v431 = vand.u32 %v41, 4294901760
    %432 = vmatpush1.msra.mxu0 %v431
    %433 = vmatprep.subr.mxu0 0.0
    %v434 = vand.u32 %v42, 4294901760
    %435 = vmatpush1.msra.mxu0 %v434
    %436 = vmatprep.subr.mxu0 0.0
    %v437 = vand.u32 %v43, 4294901760
    %438 = vmatpush1.msra.mxu0 %v437
    %439 = vmatprep.subr.mxu0 0.0
    %v440 = vand.u32 %v44, 4294901760
    %441 = vmatpush1.msra.mxu0 %v440
    %442 = vmatprep.subr.mxu0 0.0
    %v443 = vand.u32 %v45, 4294901760
    %444 = vmatpush1.msra.mxu0 %v443
    %445 = vmatprep.subr.mxu0 0.0
    %v446 = vand.u32 %v46, 4294901760
    %447 = vmatpush1.msra.mxu0 %v446
    %448 = vmatprep.subr.mxu0 0.0
    %449 = vmatpush1.msra.mxu0 0.0
    %450 = vmatprep.subr.mxu0 0.0
    %451 = vmatpush1.msra.mxu0 0.0
    %452 = vmatprep.subr.mxu0 0.0
    %453 = vmatpush1.msra.mxu0 0.0
    %454 = vmatprep.subr.mxu0 0.0
    %455 = vmatpush1.msra.mxu0 0.0
    %456 = vmatprep.subr.mxu0 0.0
    %457 = vmatpush1.msra.mxu0 0.0
    %458 = vmatprep.subr.mxu0 0.0
    %459 = vmatpush1.msra.mxu0 0.0
    %460 = vmatprep.subr.mxu0 0.0
    %461 = vmatpush1.msra.mxu0 0.0
    %462 = vmatprep.subr.mxu0 0.0
    %463 = vmatpush1.msra.mxu0 0.0
    %464 = vmatprep.subr.mxu0 0.0
    %465 = vmatpush1.msra.mxu0 0.0
    %466 = vmatprep.subr.mxu0 0.0
    %467 = vmatpush1.msra.mxu0 0.0
    %468 = vmatprep.subr.mxu0 0.0
    %469 = vmatpush1.msra.mxu0 0.0
    %470 = vmatprep.subr.mxu0 0.0
    %471 = vmatpush1.msra.mxu0 0.0
    %472 = vmatprep.subr.mxu0 0.0
    %473 = vmatpush1.msra.mxu0 0.0
    %474 = vmatprep.subr.mxu0 0.0
    %475 = vmatpush1.msra.mxu0 0.0
    %476 = vmatprep.subr.mxu0 0.0
    %477 = vmatpush1.msra.mxu0 0.0
    %478 = vmatprep.subr.mxu0 0.0
    %479 = vmatpush1.msra.mxu0 0.0
    %480 = vmatprep.mubr.f32.mxu0 0.0
    %v481 = vand.u32 %v30, 4294901760
    %v482 = vsub.f32 %v30, %v481
    %v483 = vand.u32 %v482, 4294901760
    %484 = vmatmul.mubr.f32.gmra.mrb[0].mxu0 %v483
    %v485 = vpop.f32.mrb[0].mxu0
    %v486 = vadd.f32 %v397, %v485
    %v487 = vpop.f32.mrb[0].mxu0
    %488 = vdwg.mxu0
    %489 = vmatprep.subr.mxu0 0.0
    %v490 = vand.u32 %v31, 4294901760
    %v491 = vsub.f32 %v31, %v490
    %v492 = vand.u32 %v491, 4294901760
    %493 = vmatpush1.msra.mxu0 %v492
    %494 = vmatprep.subr.mxu0 0.0
    %v495 = vand.u32 %v32, 4294901760
    %v496 = vsub.f32 %v32, %v495
    %v497 = vand.u32 %v496, 4294901760
    %498 = vmatpush1.msra.mxu0 %v497
    %499 = vmatprep.subr.mxu0 0.0
    %v500 = vand.u32 %v33, 4294901760
    %v501 = vsub.f32 %v33, %v500
    %v502 = vand.u32 %v501, 4294901760
    %503 = vmatpush1.msra.mxu0 %v502
    %504 = vmatprep.subr.mxu0 0.0
    %v505 = vand.u32 %v34, 4294901760
    %v506 = vsub.f32 %v34, %v505
    %v507 = vand.u32 %v506, 4294901760
    %508 = vmatpush1.msra.mxu0 %v507
    %509 = vmatprep.subr.mxu0 0.0
    %v510 = vand.u32 %v35, 4294901760
    %v511 = vsub.f32 %v35, %v510
    %v512 = vand.u32 %v511, 4294901760
    %513 = vmatpush1.msra.mxu0 %v512
    %514 = vmatprep.subr.mxu0 0.0
    %v515 = vand.u32 %v36, 4294901760
    %v516 = vsub.f32 %v36, %v515
    %v517 = vand.u32 %v516, 4294901760
    %518 = vmatpush1.msra.mxu0 %v517
    %519 = vmatprep.subr.mxu0 0.0
    %v520 = vand.u32 %v37, 4294901760
    %v521 = vsub.f32 %v37, %v520
    %v522 = vand.u32 %v521, 4294901760
    %523 = vmatpush1.msra.mxu0 %v522
    %524 = vmatprep.subr.mxu0 0.0
    %v525 = vand.u32 %v38, 4294901760
    %v526 = vsub.f32 %v38, %v525
    %v527 = vand.u32 %v526, 4294901760
    %528 = vmatpush1.msra.mxu0 %v527
    %529 = vmatprep.subr.mxu0 0.0
    %v530 = vand.u32 %v39, 4294901760
    %v531 = vsub.f32 %v39, %v530
    %v532 = vand.u32 %v531, 4294901760
    %533 = vmatpush1.msra.mxu0 %v532
    %534 = vmatprep.subr.mxu0 0.0
    %v535 = vand.u32 %v40, 4294901760
    %v536 = vsub.f32 %v40, %v535
    %v537 = vand.u32 %v536, 4294901760
    %538 = vmatpush1.msra.mxu0 %v537
    %539 = vmatprep.subr.mxu0 0.0
    %v540 = vand.u32 %v41, 4294901760
    %v541 = vsub.f32 %v41, %v540
    %v542 = vand.u32 %v541, 4294901760
    %543 = vmatpush1.msra.mxu0 %v542
    %544 = vmatprep.subr.mxu0 0.0
    %v545 = vand.u32 %v42, 4294901760
    %v546 = vsub.f32 %v42, %v545
    %v547 = vand.u32 %v546, 4294901760
    %548 = vmatpush1.msra.mxu0 %v547
    %549 = vmatprep.subr.mxu0 0.0
    %v550 = vand.u32 %v43, 4294901760
    %v551 = vsub.f32 %v43, %v550
    %v552 = vand.u32 %v551, 4294901760
    %553 = vmatpush1.msra.mxu0 %v552
    %554 = vmatprep.subr.mxu0 0.0
    %v555 = vand.u32 %v44, 4294901760
    %v556 = vsub.f32 %v44, %v555
    %v557 = vand.u32 %v556, 4294901760
    %558 = vmatpush1.msra.mxu0 %v557
    %559 = vmatprep.subr.mxu0 0.0
    %v560 = vand.u32 %v45, 4294901760
    %v561 = vsub.f32 %v45, %v560
    %v562 = vand.u32 %v561, 4294901760
    %563 = vmatpush1.msra.mxu0 %v562
    %564 = vmatprep.subr.mxu0 0.0
    %v565 = vand.u32 %v46, 4294901760
    %v566 = vsub.f32 %v46, %v565
    %v567 = vand.u32 %v566, 4294901760
    %568 = vmatpush1.msra.mxu0 %v567
    %569 = vmatprep.subr.mxu0 0.0
    %570 = vmatpush1.msra.mxu0 0.0
    %571 = vmatprep.subr.mxu0 0.0
    %572 = vmatpush1.msra.mxu0 0.0
    %573 = vmatprep.subr.mxu0 0.0
    %574 = vmatpush1.msra.mxu0 0.0
    %575 = vmatprep.subr.mxu0 0.0
    %576 = vmatpush1.msra.mxu0 0.0
    %577 = vmatprep.subr.mxu0 0.0
    %578 = vmatpush1.msra.mxu0 0.0
    %579 = vmatprep.subr.mxu0 0.0
    %580 = vmatpush1.msra.mxu0 0.0
    %581 = vmatprep.subr.mxu0 0.0
    %582 = vmatpush1.msra.mxu0 0.0
    %583 = vmatprep.subr.mxu0 0.0
    %584 = vmatpush1.msra.mxu0 0.0
    %585 = vmatprep.subr.mxu0 0.0
    %586 = vmatpush1.msra.mxu0 0.0
    %587 = vmatprep.subr.mxu0 0.0
    %588 = vmatpush1.msra.mxu0 0.0
    %589 = vmatprep.subr.mxu0 0.0
    %590 = vmatpush1.msra.mxu0 0.0
    %591 = vmatprep.subr.mxu0 0.0
    %592 = vmatpush1.msra.mxu0 0.0
    %593 = vmatprep.subr.mxu0 0.0
    %594 = vmatpush1.msra.mxu0 0.0
    %595 = vmatprep.subr.mxu0 0.0
    %596 = vmatpush1.msra.mxu0 0.0
    %597 = vmatprep.subr.mxu0 0.0
    %598 = vmatpush1.msra.mxu0 0.0
    %599 = vmatprep.subr.mxu0 0.0
    %600 = vmatpush1.msra.mxu0 0.0
    %601 = vmatprep.mubr.f32.mxu0 0.0
    %v602 = vand.u32 %v30, 4294901760
    %603 = vmatmul.mubr.f32.gmra.mrb[0].mxu0 %v602
    %v604 = vpop.f32.mrb[0].mxu0
    %v605 = vadd.f32 %v486, %v604
    %v606 = vpop.f32.mrb[0].mxu0
    %607 = vdwg.mxu0
    %608 = vmatprep.subr.mxu0 0.0
    %v609 = vand.u32 %v31, 4294901760
    %610 = vmatpush1.msra.mxu0 %v609
    %611 = vmatprep.subr.mxu0 0.0
    %v612 = vand.u32 %v32, 4294901760
    %613 = vmatpush1.msra.mxu0 %v612
    %614 = vmatprep.subr.mxu0 0.0
    %v615 = vand.u32 %v33, 4294901760
    %616 = vmatpush1.msra.mxu0 %v615
    %617 = vmatprep.subr.mxu0 0.0
    %v618 = vand.u32 %v34, 4294901760
    %619 = vmatpush1.msra.mxu0 %v618
    %620 = vmatprep.subr.mxu0 0.0
    %v621 = vand.u32 %v35, 4294901760
    %622 = vmatpush1.msra.mxu0 %v621
    %623 = vmatprep.subr.mxu0 0.0
    %v624 = vand.u32 %v36, 4294901760
    %625 = vmatpush1.msra.mxu0 %v624
    %626 = vmatprep.subr.mxu0 0.0
    %v627 = vand.u32 %v37, 4294901760
    %628 = vmatpush1.msra.mxu0 %v627
    %629 = vmatprep.subr.mxu0 0.0
    %v630 = vand.u32 %v38, 4294901760
    %631 = vmatpush1.msra.mxu0 %v630
    %632 = vmatprep.subr.mxu0 0.0
    %v633 = vand.u32 %v39, 4294901760
    %634 = vmatpush1.msra.mxu0 %v633
    %635 = vmatprep.subr.mxu0 0.0
    %v636 = vand.u32 %v40, 4294901760
    %637 = vmatpush1.msra.mxu0 %v636
    %638 = vmatprep.subr.mxu0 0.0
    %v639 = vand.u32 %v41, 4294901760
    %640 = vmatpush1.msra.mxu0 %v639
    %641 = vmatprep.subr.mxu0 0.0
    %v642 = vand.u32 %v42, 4294901760
    %643 = vmatpush1.msra.mxu0 %v642
    %644 = vmatprep.subr.mxu0 0.0
    %v645 = vand.u32 %v43, 4294901760
    %646 = vmatpush1.msra.mxu0 %v645
    %647 = vmatprep.subr.mxu0 0.0
    %v648 = vand.u32 %v44, 4294901760
    %649 = vmatpush1.msra.mxu0 %v648
    %650 = vmatprep.subr.mxu0 0.0
    %v651 = vand.u32 %v45, 4294901760
    %652 = vmatpush1.msra.mxu0 %v651
    %653 = vmatprep.subr.mxu0 0.0
    %v654 = vand.u32 %v46, 4294901760
    %655 = vmatpush1.msra.mxu0 %v654
    %656 = vmatprep.subr.mxu0 0.0
    %657 = vmatpush1.msra.mxu0 0.0
    %658 = vmatprep.subr.mxu0 0.0
    %659 = vmatpush1.msra.mxu0 0.0
    %660 = vmatprep.subr.mxu0 0.0
    %661 = vmatpush1.msra.mxu0 0.0
    %662 = vmatprep.subr.mxu0 0.0
    %663 = vmatpush1.msra.mxu0 0.0
    %664 = vmatprep.subr.mxu0 0.0
    %665 = vmatpush1.msra.mxu0 0.0
    %666 = vmatprep.subr.mxu0 0.0
    %667 = vmatpush1.msra.mxu0 0.0
    %668 = vmatprep.subr.mxu0 0.0
    %669 = vmatpush1.msra.mxu0 0.0
    %670 = vmatprep.subr.mxu0 0.0
    %671 = vmatpush1.msra.mxu0 0.0
    %672 = vmatprep.subr.mxu0 0.0
    %673 = vmatpush1.msra.mxu0 0.0
    %674 = vmatprep.subr.mxu0 0.0
    %675 = vmatpush1.msra.mxu0 0.0
    %676 = vmatprep.subr.mxu0 0.0
    %677 = vmatpush1.msra.mxu0 0.0
    %678 = vmatprep.subr.mxu0 0.0
    %679 = vmatpush1.msra.mxu0 0.0
    %680 = vmatprep.subr.mxu0 0.0
    %681 = vmatpush1.msra.mxu0 0.0
    %682 = vmatprep.subr.mxu0 0.0
    %683 = vmatpush1.msra.mxu0 0.0
    %684 = vmatprep.subr.mxu0 0.0
    %685 = vmatpush1.msra.mxu0 0.0
    %686 = vmatprep.subr.mxu0 0.0
    %687 = vmatpush1.msra.mxu0 0.0
    %688 = vmatprep.mubr.f32.mxu0 0.0
    %v689 = vand.u32 %v30, 4294901760
    %690 = vmatmul.mubr.f32.gmra.mrb[0].mxu0 %v689
    %v691 = vpop.f32.mrb[0].mxu0
    %v692 = vadd.f32 %v605, %v691
    %v693 = vpop.f32.mrb[0].mxu0
    %694 = vdwg.mxu0
    %v695 = vmul.f32 %v692, %v692
    %696 = vadd.xlane.f32.xlu0 %v695
    %v697 = vpop.xlane.xlu0 %696
    %v698 = vmax.f32 %v697, 1e-24
    %v699 = vrsqrt.pop %v698
    %v700 = vmul.f32 %v692, %v699
    %v701 = vld [vmem:[%s1] sm:$0xff]
    %v702 = vld [vmem:[%s4] sm:$0xff]
    %v703 = vld [vmem:[%s4 + $0x8] sm:$0xff]
    %v704 = vld [vmem:[%s4 + $0x10] sm:$0xff]
    %v705 = vld [vmem:[%s4 + $0x18] sm:$0xff]
    %v706 = vld [vmem:[%s4 + $0x20] sm:$0xff]
    %v707 = vld [vmem:[%s4 + $0x28] sm:$0xff]
    %v708 = vld [vmem:[%s4 + $0x30] sm:$0xff]
    %v709 = vld [vmem:[%s4 + $0x38] sm:$0xff]
    %v710 = vld [vmem:[%s4 + $0x40] sm:$0xff]
    %v711 = vld [vmem:[%s4 + $0x48] sm:$0xff]
    %v712 = vld [vmem:[%s4 + $0x50] sm:$0xff]
    %v713 = vld [vmem:[%s4 + $0x58] sm:$0xff]
    %v714 = vld [vmem:[%s4 + $0x60] sm:$0xff]
    %v715 = vld [vmem:[%s4 + $0x68] sm:$0xff]
    %v716 = vld [vmem:[%s4 + $0x70] sm:$0xff]
    %v717 = vld [vmem:[%s4 + $0x78] sm:$0xff]
    %v718 = vld [vmem:[%s5] sm:$0x1]
    %v720 = vlaneseq
    %v721 = vshrl.u32 %v720, 7
    %v722 = vsub.s32 0, %v721
    %v723 = vrot.slane %v718, %v722
    %725 = vmatprep.subr.mxu0 0.0
    %v726 = vand.u32 %v702, 4294901760
    %727 = vmatpush1.msra.mxu0 %v726
    %728 = vmatprep.subr.mxu0 0.0
    %v729 = vand.u32 %v703, 4294901760
    %730 = vmatpush1.msra.mxu0 %v729
    %731 = vmatprep.subr.mxu0 0.0
    %v732 = vand.u32 %v704, 4294901760
    %733 = vmatpush1.msra.mxu0 %v732
    %734 = vmatprep.subr.mxu0 0.0
    %v735 = vand.u32 %v705, 4294901760
    %736 = vmatpush1.msra.mxu0 %v735
    %737 = vmatprep.subr.mxu0 0.0
    %v738 = vand.u32 %v706, 4294901760
    %739 = vmatpush1.msra.mxu0 %v738
    %740 = vmatprep.subr.mxu0 0.0
    %v741 = vand.u32 %v707, 4294901760
    %742 = vmatpush1.msra.mxu0 %v741
    %743 = vmatprep.subr.mxu0 0.0
    %v744 = vand.u32 %v708, 4294901760
    %745 = vmatpush1.msra.mxu0 %v744
    %746 = vmatprep.subr.mxu0 0.0
    %v747 = vand.u32 %v709, 4294901760
    %748 = vmatpush1.msra.mxu0 %v747
    %749 = vmatprep.subr.mxu0 0.0
    %v750 = vand.u32 %v710, 4294901760
    %751 = vmatpush1.msra.mxu0 %v750
    %752 = vmatprep.subr.mxu0 0.0
    %v753 = vand.u32 %v711, 4294901760
    %754 = vmatpush1.msra.mxu0 %v753
    %755 = vmatprep.subr.mxu0 0.0
    %v756 = vand.u32 %v712, 4294901760
    %757 = vmatpush1.msra.mxu0 %v756
    %758 = vmatprep.subr.mxu0 0.0
    %v759 = vand.u32 %v713, 4294901760
    %760 = vmatpush1.msra.mxu0 %v759
    %761 = vmatprep.subr.mxu0 0.0
    %v762 = vand.u32 %v714, 4294901760
    %763 = vmatpush1.msra.mxu0 %v762
    %764 = vmatprep.subr.mxu0 0.0
    %v765 = vand.u32 %v715, 4294901760
    %766 = vmatpush1.msra.mxu0 %v765
    %767 = vmatprep.subr.mxu0 0.0
    %v768 = vand.u32 %v716, 4294901760
    %769 = vmatpush1.msra.mxu0 %v768
    %770 = vmatprep.subr.mxu0 0.0
    %v771 = vand.u32 %v717, 4294901760
    %772 = vmatpush1.msra.mxu0 %v771
    %773 = vmatprep.subr.mxu0 0.0
    %774 = vmatpush1.msra.mxu0 0.0
    %775 = vmatprep.subr.mxu0 0.0
    %776 = vmatpush1.msra.mxu0 0.0
    %777 = vmatprep.subr.mxu0 0.0
    %778 = vmatpush1.msra.mxu0 0.0
    %779 = vmatprep.subr.mxu0 0.0
    %780 = vmatpush1.msra.mxu0 0.0
    %781 = vmatprep.subr.mxu0 0.0
    %782 = vmatpush1.msra.mxu0 0.0
    %783 = vmatprep.subr.mxu0 0.0
    %784 = vmatpush1.msra.mxu0 0.0
    %785 = vmatprep.subr.mxu0 0.0
    %786 = vmatpush1.msra.mxu0 0.0
    %787 = vmatprep.subr.mxu0 0.0
    %788 = vmatpush1.msra.mxu0 0.0
    %789 = vmatprep.subr.mxu0 0.0
    %790 = vmatpush1.msra.mxu0 0.0
    %791 = vmatprep.subr.mxu0 0.0
    %792 = vmatpush1.msra.mxu0 0.0
    %793 = vmatprep.subr.mxu0 0.0
    %794 = vmatpush1.msra.mxu0 0.0
    %795 = vmatprep.subr.mxu0 0.0
    %796 = vmatpush1.msra.mxu0 0.0
    %797 = vmatprep.subr.mxu0 0.0
    %798 = vmatpush1.msra.mxu0 0.0
    %799 = vmatprep.subr.mxu0 0.0
    %800 = vmatpush1.msra.mxu0 0.0
    %801 = vmatprep.subr.mxu0 0.0
    %802 = vmatpush1.msra.mxu0 0.0
    %803 = vmatprep.subr.mxu0 0.0
    %804 = vmatpush1.msra.mxu0 0.0
    %805 = vmatprep.mubr.f32.mxu0 0.0
    %v806 = vand.u32 %v701, 4294901760
    %v807 = vsub.f32 %v701, %v806
    %v808 = vand.u32 %v807, 4294901760
    %v809 = vsub.f32 %v807, %v808
    %v810 = vand.u32 %v809, 4294901760
    %811 = vmatmul.mubr.f32.gmra.mrb[0].mxu0 %v810
    %v812 = vpop.f32.mrb[0].mxu0
    %v813 = vadd.f32 %v723, %v812
    %v814 = vpop.f32.mrb[0].mxu0
    %815 = vdwg.mxu0
    %816 = vmatprep.subr.mxu0 0.0
    %v817 = vand.u32 %v702, 4294901760
    %v818 = vsub.f32 %v702, %v817
    %v819 = vand.u32 %v818, 4294901760
    %v820 = vsub.f32 %v818, %v819
    %v821 = vand.u32 %v820, 4294901760
    %822 = vmatpush1.msra.mxu0 %v821
    %823 = vmatprep.subr.mxu0 0.0
    %v824 = vand.u32 %v703, 4294901760
    %v825 = vsub.f32 %v703, %v824
    %v826 = vand.u32 %v825, 4294901760
    %v827 = vsub.f32 %v825, %v826
    %v828 = vand.u32 %v827, 4294901760
    %829 = vmatpush1.msra.mxu0 %v828
    %830 = vmatprep.subr.mxu0 0.0
    %v831 = vand.u32 %v704, 4294901760
    %v832 = vsub.f32 %v704, %v831
    %v833 = vand.u32 %v832, 4294901760
    %v834 = vsub.f32 %v832, %v833
    %v835 = vand.u32 %v834, 4294901760
    %836 = vmatpush1.msra.mxu0 %v835
    %837 = vmatprep.subr.mxu0 0.0
    %v838 = vand.u32 %v705, 4294901760
    %v839 = vsub.f32 %v705, %v838
    %v840 = vand.u32 %v839, 4294901760
    %v841 = vsub.f32 %v839, %v840
    %v842 = vand.u32 %v841, 4294901760
    %843 = vmatpush1.msra.mxu0 %v842
    %844 = vmatprep.subr.mxu0 0.0
    %v845 = vand.u32 %v706, 4294901760
    %v846 = vsub.f32 %v706, %v845
    %v847 = vand.u32 %v846, 4294901760
    %v848 = vsub.f32 %v846, %v847
    %v849 = vand.u32 %v848, 4294901760
    %850 = vmatpush1.msra.mxu0 %v849
    %851 = vmatprep.subr.mxu0 0.0
    %v852 = vand.u32 %v707, 4294901760
    %v853 = vsub.f32 %v707, %v852
    %v854 = vand.u32 %v853, 4294901760
    %v855 = vsub.f32 %v853, %v854
    %v856 = vand.u32 %v855, 4294901760
    %857 = vmatpush1.msra.mxu0 %v856
    %858 = vmatprep.subr.mxu0 0.0
    %v859 = vand.u32 %v708, 4294901760
    %v860 = vsub.f32 %v708, %v859
    %v861 = vand.u32 %v860, 4294901760
    %v862 = vsub.f32 %v860, %v861
    %v863 = vand.u32 %v862, 4294901760
    %864 = vmatpush1.msra.mxu0 %v863
    %865 = vmatprep.subr.mxu0 0.0
    %v866 = vand.u32 %v709, 4294901760
    %v867 = vsub.f32 %v709, %v866
    %v868 = vand.u32 %v867, 4294901760
    %v869 = vsub.f32 %v867, %v868
    %v870 = vand.u32 %v869, 4294901760
    %871 = vmatpush1.msra.mxu0 %v870
    %872 = vmatprep.subr.mxu0 0.0
    %v873 = vand.u32 %v710, 4294901760
    %v874 = vsub.f32 %v710, %v873
    %v875 = vand.u32 %v874, 4294901760
    %v876 = vsub.f32 %v874, %v875
    %v877 = vand.u32 %v876, 4294901760
    %878 = vmatpush1.msra.mxu0 %v877
    %879 = vmatprep.subr.mxu0 0.0
    %v880 = vand.u32 %v711, 4294901760
    %v881 = vsub.f32 %v711, %v880
    %v882 = vand.u32 %v881, 4294901760
    %v883 = vsub.f32 %v881, %v882
    %v884 = vand.u32 %v883, 4294901760
    %885 = vmatpush1.msra.mxu0 %v884
    %886 = vmatprep.subr.mxu0 0.0
    %v887 = vand.u32 %v712, 4294901760
    %v888 = vsub.f32 %v712, %v887
    %v889 = vand.u32 %v888, 4294901760
    %v890 = vsub.f32 %v888, %v889
    %v891 = vand.u32 %v890, 4294901760
    %892 = vmatpush1.msra.mxu0 %v891
    %893 = vmatprep.subr.mxu0 0.0
    %v894 = vand.u32 %v713, 4294901760
    %v895 = vsub.f32 %v713, %v894
    %v896 = vand.u32 %v895, 4294901760
    %v897 = vsub.f32 %v895, %v896
    %v898 = vand.u32 %v897, 4294901760
    %899 = vmatpush1.msra.mxu0 %v898
    %900 = vmatprep.subr.mxu0 0.0
    %v901 = vand.u32 %v714, 4294901760
    %v902 = vsub.f32 %v714, %v901
    %v903 = vand.u32 %v902, 4294901760
    %v904 = vsub.f32 %v902, %v903
    %v905 = vand.u32 %v904, 4294901760
    %906 = vmatpush1.msra.mxu0 %v905
    %907 = vmatprep.subr.mxu0 0.0
    %v908 = vand.u32 %v715, 4294901760
    %v909 = vsub.f32 %v715, %v908
    %v910 = vand.u32 %v909, 4294901760
    %v911 = vsub.f32 %v909, %v910
    %v912 = vand.u32 %v911, 4294901760
    %913 = vmatpush1.msra.mxu0 %v912
    %914 = vmatprep.subr.mxu0 0.0
    %v915 = vand.u32 %v716, 4294901760
    %v916 = vsub.f32 %v716, %v915
    %v917 = vand.u32 %v916, 4294901760
    %v918 = vsub.f32 %v916, %v917
    %v919 = vand.u32 %v918, 4294901760
    %920 = vmatpush1.msra.mxu0 %v919
    %921 = vmatprep.subr.mxu0 0.0
    %v922 = vand.u32 %v717, 4294901760
    %v923 = vsub.f32 %v717, %v922
    %v924 = vand.u32 %v923, 4294901760
    %v925 = vsub.f32 %v923, %v924
    %v926 = vand.u32 %v925, 4294901760
    %927 = vmatpush1.msra.mxu0 %v926
    %928 = vmatprep.subr.mxu0 0.0
    %929 = vmatpush1.msra.mxu0 0.0
    %930 = vmatprep.subr.mxu0 0.0
    %931 = vmatpush1.msra.mxu0 0.0
    %932 = vmatprep.subr.mxu0 0.0
    %933 = vmatpush1.msra.mxu0 0.0
    %934 = vmatprep.subr.mxu0 0.0
    %935 = vmatpush1.msra.mxu0 0.0
    %936 = vmatprep.subr.mxu0 0.0
    %937 = vmatpush1.msra.mxu0 0.0
    %938 = vmatprep.subr.mxu0 0.0
    %939 = vmatpush1.msra.mxu0 0.0
    %940 = vmatprep.subr.mxu0 0.0
    %941 = vmatpush1.msra.mxu0 0.0
    %942 = vmatprep.subr.mxu0 0.0
    %943 = vmatpush1.msra.mxu0 0.0
    %944 = vmatprep.subr.mxu0 0.0
    %945 = vmatpush1.msra.mxu0 0.0
    %946 = vmatprep.subr.mxu0 0.0
    %947 = vmatpush1.msra.mxu0 0.0
    %948 = vmatprep.subr.mxu0 0.0
    %949 = vmatpush1.msra.mxu0 0.0
    %950 = vmatprep.subr.mxu0 0.0
    %951 = vmatpush1.msra.mxu0 0.0
    %952 = vmatprep.subr.mxu0 0.0
    %953 = vmatpush1.msra.mxu0 0.0
    %954 = vmatprep.subr.mxu0 0.0
    %955 = vmatpush1.msra.mxu0 0.0
    %956 = vmatprep.subr.mxu0 0.0
    %957 = vmatpush1.msra.mxu0 0.0
    %958 = vmatprep.subr.mxu0 0.0
    %959 = vmatpush1.msra.mxu0 0.0
    %960 = vmatprep.mubr.f32.mxu0 0.0
    %v961 = vand.u32 %v701, 4294901760
    %962 = vmatmul.mubr.f32.gmra.mrb[0].mxu0 %v961
    %v963 = vpop.f32.mrb[0].mxu0
    %v964 = vadd.f32 %v813, %v963
    %v965 = vpop.f32.mrb[0].mxu0
    %966 = vdwg.mxu0
    %967 = vmatprep.subr.mxu0 0.0
    %v968 = vand.u32 %v702, 4294901760
    %v969 = vsub.f32 %v702, %v968
    %970 = vmatpush1.msra.mxu0 %v969
    %971 = vmatprep.subr.mxu0 0.0
    %v972 = vand.u32 %v703, 4294901760
    %v973 = vsub.f32 %v703, %v972
    %974 = vmatpush1.msra.mxu0 %v973
    %975 = vmatprep.subr.mxu0 0.0
    %v976 = vand.u32 %v704, 4294901760
    %v977 = vsub.f32 %v704, %v976
    %978 = vmatpush1.msra.mxu0 %v977
    %979 = vmatprep.subr.mxu0 0.0
    %v980 = vand.u32 %v705, 4294901760
    %v981 = vsub.f32 %v705, %v980
    %982 = vmatpush1.msra.mxu0 %v981
    %983 = vmatprep.subr.mxu0 0.0
    %v984 = vand.u32 %v706, 4294901760
    %v985 = vsub.f32 %v706, %v984
    %986 = vmatpush1.msra.mxu0 %v985
    %987 = vmatprep.subr.mxu0 0.0
    %v988 = vand.u32 %v707, 4294901760
    %v989 = vsub.f32 %v707, %v988
    %990 = vmatpush1.msra.mxu0 %v989
    %991 = vmatprep.subr.mxu0 0.0
    %v992 = vand.u32 %v708, 4294901760
    %v993 = vsub.f32 %v708, %v992
    %994 = vmatpush1.msra.mxu0 %v993
    %995 = vmatprep.subr.mxu0 0.0
    %v996 = vand.u32 %v709, 4294901760
    %v997 = vsub.f32 %v709, %v996
    %998 = vmatpush1.msra.mxu0 %v997
    %999 = vmatprep.subr.mxu0 0.0
    %v1000 = vand.u32 %v710, 4294901760
    %v1001 = vsub.f32 %v710, %v1000
    %1002 = vmatpush1.msra.mxu0 %v1001
    %1003 = vmatprep.subr.mxu0 0.0
    %v1004 = vand.u32 %v711, 4294901760
    %v1005 = vsub.f32 %v711, %v1004
    %1006 = vmatpush1.msra.mxu0 %v1005
    %1007 = vmatprep.subr.mxu0 0.0
    %v1008 = vand.u32 %v712, 4294901760
    %v1009 = vsub.f32 %v712, %v1008
    %1010 = vmatpush1.msra.mxu0 %v1009
    %1011 = vmatprep.subr.mxu0 0.0
    %v1012 = vand.u32 %v713, 4294901760
    %v1013 = vsub.f32 %v713, %v1012
    %1014 = vmatpush1.msra.mxu0 %v1013
    %1015 = vmatprep.subr.mxu0 0.0
    %v1016 = vand.u32 %v714, 4294901760
    %v1017 = vsub.f32 %v714, %v1016
    %1018 = vmatpush1.msra.mxu0 %v1017
    %1019 = vmatprep.subr.mxu0 0.0
    %v1020 = vand.u32 %v715, 4294901760
    %v1021 = vsub.f32 %v715, %v1020
    %1022 = vmatpush1.msra.mxu0 %v1021
    %1023 = vmatprep.subr.mxu0 0.0
    %v1024 = vand.u32 %v716, 4294901760
    %v1025 = vsub.f32 %v716, %v1024
    %1026 = vmatpush1.msra.mxu0 %v1025
    %1027 = vmatprep.subr.mxu0 0.0
    %v1028 = vand.u32 %v717, 4294901760
    %v1029 = vsub.f32 %v717, %v1028
    %1030 = vmatpush1.msra.mxu0 %v1029
    %1031 = vmatprep.subr.mxu0 0.0
    %1032 = vmatpush1.msra.mxu0 0.0
    %1033 = vmatprep.subr.mxu0 0.0
    %1034 = vmatpush1.msra.mxu0 0.0
    %1035 = vmatprep.subr.mxu0 0.0
    %1036 = vmatpush1.msra.mxu0 0.0
    %1037 = vmatprep.subr.mxu0 0.0
    %1038 = vmatpush1.msra.mxu0 0.0
    %1039 = vmatprep.subr.mxu0 0.0
    %1040 = vmatpush1.msra.mxu0 0.0
    %1041 = vmatprep.subr.mxu0 0.0
    %1042 = vmatpush1.msra.mxu0 0.0
    %1043 = vmatprep.subr.mxu0 0.0
    %1044 = vmatpush1.msra.mxu0 0.0
    %1045 = vmatprep.subr.mxu0 0.0
    %1046 = vmatpush1.msra.mxu0 0.0
    %1047 = vmatprep.subr.mxu0 0.0
    %1048 = vmatpush1.msra.mxu0 0.0
    %1049 = vmatprep.subr.mxu0 0.0
    %1050 = vmatpush1.msra.mxu0 0.0
    %1051 = vmatprep.subr.mxu0 0.0
    %1052 = vmatpush1.msra.mxu0 0.0
    %1053 = vmatprep.subr.mxu0 0.0
    %1054 = vmatpush1.msra.mxu0 0.0
    %1055 = vmatprep.subr.mxu0 0.0
    %1056 = vmatpush1.msra.mxu0 0.0
    %1057 = vmatprep.subr.mxu0 0.0
    %1058 = vmatpush1.msra.mxu0 0.0
    %1059 = vmatprep.subr.mxu0 0.0
    %1060 = vmatpush1.msra.mxu0 0.0
    %1061 = vmatprep.subr.mxu0 0.0
    %1062 = vmatpush1.msra.mxu0 0.0
    %1063 = vmatprep.mubr.f32.mxu0 0.0
    %v1064 = vand.u32 %v701, 4294901760
    %v1065 = vsub.f32 %v701, %v1064
    %1066 = vmatmul.mubr.f32.gmra.mrb[0].mxu0 %v1065
    %v1067 = vpop.f32.mrb[0].mxu0
    %v1068 = vadd.f32 %v964, %v1067
    %v1069 = vpop.f32.mrb[0].mxu0
    %1070 = vdwg.mxu0
    %1071 = vmatprep.subr.mxu0 0.0
    %v1072 = vand.u32 %v702, 4294901760
    %1073 = vmatpush1.msra.mxu0 %v1072
    %1074 = vmatprep.subr.mxu0 0.0
    %v1075 = vand.u32 %v703, 4294901760
    %1076 = vmatpush1.msra.mxu0 %v1075
    %1077 = vmatprep.subr.mxu0 0.0
    %v1078 = vand.u32 %v704, 4294901760
    %1079 = vmatpush1.msra.mxu0 %v1078
    %1080 = vmatprep.subr.mxu0 0.0
    %v1081 = vand.u32 %v705, 4294901760
    %1082 = vmatpush1.msra.mxu0 %v1081
    %1083 = vmatprep.subr.mxu0 0.0
    %v1084 = vand.u32 %v706, 4294901760
    %1085 = vmatpush1.msra.mxu0 %v1084
    %1086 = vmatprep.subr.mxu0 0.0
    %v1087 = vand.u32 %v707, 4294901760
    %1088 = vmatpush1.msra.mxu0 %v1087
    %1089 = vmatprep.subr.mxu0 0.0
    %v1090 = vand.u32 %v708, 4294901760
    %1091 = vmatpush1.msra.mxu0 %v1090
    %1092 = vmatprep.subr.mxu0 0.0
    %v1093 = vand.u32 %v709, 4294901760
    %1094 = vmatpush1.msra.mxu0 %v1093
    %1095 = vmatprep.subr.mxu0 0.0
    %v1096 = vand.u32 %v710, 4294901760
    %1097 = vmatpush1.msra.mxu0 %v1096
    %1098 = vmatprep.subr.mxu0 0.0
    %v1099 = vand.u32 %v711, 4294901760
    %1100 = vmatpush1.msra.mxu0 %v1099
    %1101 = vmatprep.subr.mxu0 0.0
    %v1102 = vand.u32 %v712, 4294901760
    %1103 = vmatpush1.msra.mxu0 %v1102
    %1104 = vmatprep.subr.mxu0 0.0
    %v1105 = vand.u32 %v713, 4294901760
    %1106 = vmatpush1.msra.mxu0 %v1105
    %1107 = vmatprep.subr.mxu0 0.0
    %v1108 = vand.u32 %v714, 4294901760
    %1109 = vmatpush1.msra.mxu0 %v1108
    %1110 = vmatprep.subr.mxu0 0.0
    %v1111 = vand.u32 %v715, 4294901760
    %1112 = vmatpush1.msra.mxu0 %v1111
    %1113 = vmatprep.subr.mxu0 0.0
    %v1114 = vand.u32 %v716, 4294901760
    %1115 = vmatpush1.msra.mxu0 %v1114
    %1116 = vmatprep.subr.mxu0 0.0
    %v1117 = vand.u32 %v717, 4294901760
    %1118 = vmatpush1.msra.mxu0 %v1117
    %1119 = vmatprep.subr.mxu0 0.0
    %1120 = vmatpush1.msra.mxu0 0.0
    %1121 = vmatprep.subr.mxu0 0.0
    %1122 = vmatpush1.msra.mxu0 0.0
    %1123 = vmatprep.subr.mxu0 0.0
    %1124 = vmatpush1.msra.mxu0 0.0
    %1125 = vmatprep.subr.mxu0 0.0
    %1126 = vmatpush1.msra.mxu0 0.0
    %1127 = vmatprep.subr.mxu0 0.0
    %1128 = vmatpush1.msra.mxu0 0.0
    %1129 = vmatprep.subr.mxu0 0.0
    %1130 = vmatpush1.msra.mxu0 0.0
    %1131 = vmatprep.subr.mxu0 0.0
    %1132 = vmatpush1.msra.mxu0 0.0
    %1133 = vmatprep.subr.mxu0 0.0
    %1134 = vmatpush1.msra.mxu0 0.0
    %1135 = vmatprep.subr.mxu0 0.0
    %1136 = vmatpush1.msra.mxu0 0.0
    %1137 = vmatprep.subr.mxu0 0.0
    %1138 = vmatpush1.msra.mxu0 0.0
    %1139 = vmatprep.subr.mxu0 0.0
    %1140 = vmatpush1.msra.mxu0 0.0
    %1141 = vmatprep.subr.mxu0 0.0
    %1142 = vmatpush1.msra.mxu0 0.0
    %1143 = vmatprep.subr.mxu0 0.0
    %1144 = vmatpush1.msra.mxu0 0.0
    %1145 = vmatprep.subr.mxu0 0.0
    %1146 = vmatpush1.msra.mxu0 0.0
    %1147 = vmatprep.subr.mxu0 0.0
    %1148 = vmatpush1.msra.mxu0 0.0
    %1149 = vmatprep.subr.mxu0 0.0
    %1150 = vmatpush1.msra.mxu0 0.0
    %1151 = vmatprep.mubr.f32.mxu0 0.0
    %v1152 = vand.u32 %v701, 4294901760
    %v1153 = vsub.f32 %v701, %v1152
    %v1154 = vand.u32 %v1153, 4294901760
    %1155 = vmatmul.mubr.f32.gmra.mrb[0].mxu0 %v1154
    %v1156 = vpop.f32.mrb[0].mxu0
    %v1157 = vadd.f32 %v1068, %v1156
    %v1158 = vpop.f32.mrb[0].mxu0
    %1159 = vdwg.mxu0
    %1160 = vmatprep.subr.mxu0 0.0
    %v1161 = vand.u32 %v702, 4294901760
    %v1162 = vsub.f32 %v702, %v1161
    %v1163 = vand.u32 %v1162, 4294901760
    %1164 = vmatpush1.msra.mxu0 %v1163
    %1165 = vmatprep.subr.mxu0 0.0
    %v1166 = vand.u32 %v703, 4294901760
    %v1167 = vsub.f32 %v703, %v1166
    %v1168 = vand.u32 %v1167, 4294901760
    %1169 = vmatpush1.msra.mxu0 %v1168
    %1170 = vmatprep.subr.mxu0 0.0
    %v1171 = vand.u32 %v704, 4294901760
    %v1172 = vsub.f32 %v704, %v1171
    %v1173 = vand.u32 %v1172, 4294901760
    %1174 = vmatpush1.msra.mxu0 %v1173
    %1175 = vmatprep.subr.mxu0 0.0
    %v1176 = vand.u32 %v705, 4294901760
    %v1177 = vsub.f32 %v705, %v1176
    %v1178 = vand.u32 %v1177, 4294901760
    %1179 = vmatpush1.msra.mxu0 %v1178
    %1180 = vmatprep.subr.mxu0 0.0
    %v1181 = vand.u32 %v706, 4294901760
    %v1182 = vsub.f32 %v706, %v1181
    %v1183 = vand.u32 %v1182, 4294901760
    %1184 = vmatpush1.msra.mxu0 %v1183
    %1185 = vmatprep.subr.mxu0 0.0
    %v1186 = vand.u32 %v707, 4294901760
    %v1187 = vsub.f32 %v707, %v1186
    %v1188 = vand.u32 %v1187, 4294901760
    %1189 = vmatpush1.msra.mxu0 %v1188
    %1190 = vmatprep.subr.mxu0 0.0
    %v1191 = vand.u32 %v708, 4294901760
    %v1192 = vsub.f32 %v708, %v1191
    %v1193 = vand.u32 %v1192, 4294901760
    %1194 = vmatpush1.msra.mxu0 %v1193
    %1195 = vmatprep.subr.mxu0 0.0
    %v1196 = vand.u32 %v709, 4294901760
    %v1197 = vsub.f32 %v709, %v1196
    %v1198 = vand.u32 %v1197, 4294901760
    %1199 = vmatpush1.msra.mxu0 %v1198
    %1200 = vmatprep.subr.mxu0 0.0
    %v1201 = vand.u32 %v710, 4294901760
    %v1202 = vsub.f32 %v710, %v1201
    %v1203 = vand.u32 %v1202, 4294901760
    %1204 = vmatpush1.msra.mxu0 %v1203
    %1205 = vmatprep.subr.mxu0 0.0
    %v1206 = vand.u32 %v711, 4294901760
    %v1207 = vsub.f32 %v711, %v1206
    %v1208 = vand.u32 %v1207, 4294901760
    %1209 = vmatpush1.msra.mxu0 %v1208
    %1210 = vmatprep.subr.mxu0 0.0
    %v1211 = vand.u32 %v712, 4294901760
    %v1212 = vsub.f32 %v712, %v1211
    %v1213 = vand.u32 %v1212, 4294901760
    %1214 = vmatpush1.msra.mxu0 %v1213
    %1215 = vmatprep.subr.mxu0 0.0
    %v1216 = vand.u32 %v713, 4294901760
    %v1217 = vsub.f32 %v713, %v1216
    %v1218 = vand.u32 %v1217, 4294901760
    %1219 = vmatpush1.msra.mxu0 %v1218
    %1220 = vmatprep.subr.mxu0 0.0
    %v1221 = vand.u32 %v714, 4294901760
    %v1222 = vsub.f32 %v714, %v1221
    %v1223 = vand.u32 %v1222, 4294901760
    %1224 = vmatpush1.msra.mxu0 %v1223
    %1225 = vmatprep.subr.mxu0 0.0
    %v1226 = vand.u32 %v715, 4294901760
    %v1227 = vsub.f32 %v715, %v1226
    %v1228 = vand.u32 %v1227, 4294901760
    %1229 = vmatpush1.msra.mxu0 %v1228
    %1230 = vmatprep.subr.mxu0 0.0
    %v1231 = vand.u32 %v716, 4294901760
    %v1232 = vsub.f32 %v716, %v1231
    %v1233 = vand.u32 %v1232, 4294901760
    %1234 = vmatpush1.msra.mxu0 %v1233
    %1235 = vmatprep.subr.mxu0 0.0
    %v1236 = vand.u32 %v717, 4294901760
    %v1237 = vsub.f32 %v717, %v1236
    %v1238 = vand.u32 %v1237, 4294901760
    %1239 = vmatpush1.msra.mxu0 %v1238
    %1240 = vmatprep.subr.mxu0 0.0
    %1241 = vmatpush1.msra.mxu0 0.0
    %1242 = vmatprep.subr.mxu0 0.0
    %1243 = vmatpush1.msra.mxu0 0.0
    %1244 = vmatprep.subr.mxu0 0.0
    %1245 = vmatpush1.msra.mxu0 0.0
    %1246 = vmatprep.subr.mxu0 0.0
    %1247 = vmatpush1.msra.mxu0 0.0
    %1248 = vmatprep.subr.mxu0 0.0
    %1249 = vmatpush1.msra.mxu0 0.0
    %1250 = vmatprep.subr.mxu0 0.0
    %1251 = vmatpush1.msra.mxu0 0.0
    %1252 = vmatprep.subr.mxu0 0.0
    %1253 = vmatpush1.msra.mxu0 0.0
    %1254 = vmatprep.subr.mxu0 0.0
    %1255 = vmatpush1.msra.mxu0 0.0
    %1256 = vmatprep.subr.mxu0 0.0
    %1257 = vmatpush1.msra.mxu0 0.0
    %1258 = vmatprep.subr.mxu0 0.0
    %1259 = vmatpush1.msra.mxu0 0.0
    %1260 = vmatprep.subr.mxu0 0.0
    %1261 = vmatpush1.msra.mxu0 0.0
    %1262 = vmatprep.subr.mxu0 0.0
    %1263 = vmatpush1.msra.mxu0 0.0
    %1264 = vmatprep.subr.mxu0 0.0
    %1265 = vmatpush1.msra.mxu0 0.0
    %1266 = vmatprep.subr.mxu0 0.0
    %1267 = vmatpush1.msra.mxu0 0.0
    %1268 = vmatprep.subr.mxu0 0.0
    %1269 = vmatpush1.msra.mxu0 0.0
    %1270 = vmatprep.subr.mxu0 0.0
    %1271 = vmatpush1.msra.mxu0 0.0
    %1272 = vmatprep.mubr.f32.mxu0 0.0
    %v1273 = vand.u32 %v701, 4294901760
    %1274 = vmatmul.mubr.f32.gmra.mrb[0].mxu0 %v1273
    %v1275 = vpop.f32.mrb[0].mxu0
    %v1276 = vadd.f32 %v1157, %v1275
    %v1277 = vpop.f32.mrb[0].mxu0
    %1278 = vdwg.mxu0
    %1279 = vmatprep.subr.mxu0 0.0
    %v1280 = vand.u32 %v702, 4294901760
    %1281 = vmatpush1.msra.mxu0 %v1280
    %1282 = vmatprep.subr.mxu0 0.0
    %v1283 = vand.u32 %v703, 4294901760
    %1284 = vmatpush1.msra.mxu0 %v1283
    %1285 = vmatprep.subr.mxu0 0.0
    %v1286 = vand.u32 %v704, 4294901760
    %1287 = vmatpush1.msra.mxu0 %v1286
    %1288 = vmatprep.subr.mxu0 0.0
    %v1289 = vand.u32 %v705, 4294901760
    %1290 = vmatpush1.msra.mxu0 %v1289
    %1291 = vmatprep.subr.mxu0 0.0
    %v1292 = vand.u32 %v706, 4294901760
    %1293 = vmatpush1.msra.mxu0 %v1292
    %1294 = vmatprep.subr.mxu0 0.0
    %v1295 = vand.u32 %v707, 4294901760
    %1296 = vmatpush1.msra.mxu0 %v1295
    %1297 = vmatprep.subr.mxu0 0.0
    %v1298 = vand.u32 %v708, 4294901760
    %1299 = vmatpush1.msra.mxu0 %v1298
    %1300 = vmatprep.subr.mxu0 0.0
    %v1301 = vand.u32 %v709, 4294901760
    %1302 = vmatpush1.msra.mxu0 %v1301
    %1303 = vmatprep.subr.mxu0 0.0
    %v1304 = vand.u32 %v710, 4294901760
    %1305 = vmatpush1.msra.mxu0 %v1304
    %1306 = vmatprep.subr.mxu0 0.0
    %v1307 = vand.u32 %v711, 4294901760
    %1308 = vmatpush1.msra.mxu0 %v1307
    %1309 = vmatprep.subr.mxu0 0.0
    %v1310 = vand.u32 %v712, 4294901760
    %1311 = vmatpush1.msra.mxu0 %v1310
    %1312 = vmatprep.subr.mxu0 0.0
    %v1313 = vand.u32 %v713, 4294901760
    %1314 = vmatpush1.msra.mxu0 %v1313
    %1315 = vmatprep.subr.mxu0 0.0
    %v1316 = vand.u32 %v714, 4294901760
    %1317 = vmatpush1.msra.mxu0 %v1316
    %1318 = vmatprep.subr.mxu0 0.0
    %v1319 = vand.u32 %v715, 4294901760
    %1320 = vmatpush1.msra.mxu0 %v1319
    %1321 = vmatprep.subr.mxu0 0.0
    %v1322 = vand.u32 %v716, 4294901760
    %1323 = vmatpush1.msra.mxu0 %v1322
    %1324 = vmatprep.subr.mxu0 0.0
    %v1325 = vand.u32 %v717, 4294901760
    %1326 = vmatpush1.msra.mxu0 %v1325
    %1327 = vmatprep.subr.mxu0 0.0
    %1328 = vmatpush1.msra.mxu0 0.0
    %1329 = vmatprep.subr.mxu0 0.0
    %1330 = vmatpush1.msra.mxu0 0.0
    %1331 = vmatprep.subr.mxu0 0.0
    %1332 = vmatpush1.msra.mxu0 0.0
    %1333 = vmatprep.subr.mxu0 0.0
    %1334 = vmatpush1.msra.mxu0 0.0
    %1335 = vmatprep.subr.mxu0 0.0
    %1336 = vmatpush1.msra.mxu0 0.0
    %1337 = vmatprep.subr.mxu0 0.0
    %1338 = vmatpush1.msra.mxu0 0.0
    %1339 = vmatprep.subr.mxu0 0.0
    %1340 = vmatpush1.msra.mxu0 0.0
    %1341 = vmatprep.subr.mxu0 0.0
    %1342 = vmatpush1.msra.mxu0 0.0
    %1343 = vmatprep.subr.mxu0 0.0
    %1344 = vmatpush1.msra.mxu0 0.0
    %1345 = vmatprep.subr.mxu0 0.0
    %1346 = vmatpush1.msra.mxu0 0.0
    %1347 = vmatprep.subr.mxu0 0.0
    %1348 = vmatpush1.msra.mxu0 0.0
    %1349 = vmatprep.subr.mxu0 0.0
    %1350 = vmatpush1.msra.mxu0 0.0
    %1351 = vmatprep.subr.mxu0 0.0
    %1352 = vmatpush1.msra.mxu0 0.0
    %1353 = vmatprep.subr.mxu0 0.0
    %1354 = vmatpush1.msra.mxu0 0.0
    %1355 = vmatprep.subr.mxu0 0.0
    %1356 = vmatpush1.msra.mxu0 0.0
    %1357 = vmatprep.subr.mxu0 0.0
    %1358 = vmatpush1.msra.mxu0 0.0
    %1359 = vmatprep.mubr.f32.mxu0 0.0
    %v1360 = vand.u32 %v701, 4294901760
    %1361 = vmatmul.mubr.f32.gmra.mrb[0].mxu0 %v1360
    %v1362 = vpop.f32.mrb[0].mxu0
    %v1363 = vadd.f32 %v1276, %v1362
    %v1364 = vpop.f32.mrb[0].mxu0
    %1365 = vdwg.mxu0
    %v1366 = vmul.f32 %v1363, %v1363
    %1367 = vadd.xlane.f32.xlu0 %v1366
    %v1368 = vpop.xlane.xlu0 %1367
    %v1369 = vmax.f32 %v1368, 1e-24
    %v1370 = vrsqrt.pop %v1369
    %v1371 = vmul.f32 %v1363, %v1370
    %v1372 = vld [vmem:[#allocation2] sm:$0x1]
    %v1373 = vrot.slane %v700, 4
    %v1374 = vadd.f32 %v700, %v1373
    %v1375 = vrot.slane %v1374, 2
    %v1376 = vadd.f32 %v1374, %v1375
    %v1377 = vrot.slane %v1376, 1
    %v1378 = vadd.f32 %v1376, %v1377
    %v1379 = vadd.f32 %v1372, %v1378
    %1380 = vst [vmem:[#allocation2] sm:$0x1] %v1379
    %v1381 = vld [vmem:[#allocation3] sm:$0x1]
    %v1382 = vrot.slane %v1371, 4
    %v1383 = vadd.f32 %v1371, %v1382
    %v1384 = vrot.slane %v1383, 2
    %v1385 = vadd.f32 %v1383, %v1384
    %v1386 = vrot.slane %v1385, 1
    %v1387 = vadd.f32 %v1385, %v1386
    %v1388 = vadd.f32 %v1381, %v1387
    %1389 = vst [vmem:[#allocation3] sm:$0x1] %v1388
    %v1390 = vmul.f32 %v700, %v700
    %v1391 = vmul.f32 %v1371, %v1371
    %v1392 = vld [vmem:[#allocation2 + $0x1] sm:$0x1]
    %v1393 = vrot.slane %v1390, 4
    %v1394 = vadd.f32 %v1390, %v1393
    %v1395 = vrot.slane %v1394, 2
    %v1396 = vadd.f32 %v1394, %v1395
    %v1397 = vrot.slane %v1396, 1
    %v1398 = vadd.f32 %v1396, %v1397
    %v1399 = vadd.f32 %v1392, %v1398
    %1400 = vst [vmem:[#allocation2 + $0x1] sm:$0x1] %v1399
    %v1401 = vld [vmem:[#allocation3 + $0x1] sm:$0x1]
    %v1402 = vrot.slane %v1391, 4
    %v1403 = vadd.f32 %v1391, %v1402
    %v1404 = vrot.slane %v1403, 2
    %v1405 = vadd.f32 %v1403, %v1404
    %v1406 = vrot.slane %v1405, 1
    %v1407 = vadd.f32 %v1405, %v1406
    %v1408 = vadd.f32 %v1401, %v1407
    %1409 = vst [vmem:[#allocation3 + $0x1] sm:$0x1] %v1408
    %v1410 = vmul.f32 %v1390, %v700
    %v1411 = vmul.f32 %v1391, %v1371
    %v1412 = vld [vmem:[#allocation2 + $0x2] sm:$0x1]
    %v1413 = vrot.slane %v1410, 4
    %v1414 = vadd.f32 %v1410, %v1413
    %v1415 = vrot.slane %v1414, 2
    %v1416 = vadd.f32 %v1414, %v1415
    %v1417 = vrot.slane %v1416, 1
    %v1418 = vadd.f32 %v1416, %v1417
    %v1419 = vadd.f32 %v1412, %v1418
    %1420 = vst [vmem:[#allocation2 + $0x2] sm:$0x1] %v1419
    %v1421 = vld [vmem:[#allocation3 + $0x2] sm:$0x1]
    %v1422 = vrot.slane %v1411, 4
    %v1423 = vadd.f32 %v1411, %v1422
    %v1424 = vrot.slane %v1423, 2
    %v1425 = vadd.f32 %v1423, %v1424
    %v1426 = vrot.slane %v1425, 1
    %v1427 = vadd.f32 %v1425, %v1426
    %v1428 = vadd.f32 %v1421, %v1427
    %1429 = vst [vmem:[#allocation3 + $0x2] sm:$0x1] %v1428
    %v1430 = vmul.f32 %v1410, %v700
    %v1431 = vmul.f32 %v1411, %v1371
    %v1432 = vld [vmem:[#allocation2 + $0x3] sm:$0x1]
    %v1433 = vrot.slane %v1430, 4
    %v1434 = vadd.f32 %v1430, %v1433
    %v1435 = vrot.slane %v1434, 2
    %v1436 = vadd.f32 %v1434, %v1435
    %v1437 = vrot.slane %v1436, 1
    %v1438 = vadd.f32 %v1436, %v1437
    %v1439 = vadd.f32 %v1432, %v1438
    %1440 = vst [vmem:[#allocation2 + $0x3] sm:$0x1] %v1439
    %v1441 = vld [vmem:[#allocation3 + $0x3] sm:$0x1]
    %v1442 = vrot.slane %v1431, 4
    %v1443 = vadd.f32 %v1431, %v1442
    %v1444 = vrot.slane %v1443, 2
    %v1445 = vadd.f32 %v1443, %v1444
    %v1446 = vrot.slane %v1445, 1
    %v1447 = vadd.f32 %v1445, %v1446
    %v1448 = vadd.f32 %v1441, %v1447
    %1449 = vst [vmem:[#allocation3 + $0x3] sm:$0x1] %v1448
    %v1450 = vmul.f32 %v1430, %v700
    %v1451 = vmul.f32 %v1431, %v1371
    %v1452 = vld [vmem:[#allocation2 + $0x4] sm:$0x1]
    %v1453 = vrot.slane %v1450, 4
    %v1454 = vadd.f32 %v1450, %v1453
    %v1455 = vrot.slane %v1454, 2
    %v1456 = vadd.f32 %v1454, %v1455
    %v1457 = vrot.slane %v1456, 1
    %v1458 = vadd.f32 %v1456, %v1457
    %v1459 = vadd.f32 %v1452, %v1458
    %1460 = vst [vmem:[#allocation2 + $0x4] sm:$0x1] %v1459
    %v1461 = vld [vmem:[#allocation3 + $0x4] sm:$0x1]
    %v1462 = vrot.slane %v1451, 4
    %v1463 = vadd.f32 %v1451, %v1462
    %v1464 = vrot.slane %v1463, 2
    %v1465 = vadd.f32 %v1463, %v1464
    %v1466 = vrot.slane %v1465, 1
    %v1467 = vadd.f32 %v1465, %v1466
    %v1468 = vadd.f32 %v1461, %v1467
    %1469 = vst [vmem:[#allocation3 + $0x4] sm:$0x1] %v1468
    // Predicated region
    $region30: #{sim_loss.1} parent=1 // pred_check
      %p1470 = pneg %p24
    $region31: #{sim_loss.1} parent=1 // pred_check_branch
      %1472 = sbr.rel (%p1470) target = $region33
    $region32: #{sim_loss.1} parent=1 // pred_region
      %v1473 = vld [vmem:[#allocation2] sm:$0x1]
      %v1474 = vmul.f32 %v1473, 0.125
      %v1475 = vld [vmem:[#allocation2 + $0x1] sm:$0x1]
      %v1476 = vmul.f32 %v1475, 0.125
      %v1477 = vld [vmem:[#allocation2 + $0x2] sm:$0x1]
      %v1478 = vmul.f32 %v1477, 0.125
      %v1479 = vld [vmem:[#allocation2 + $0x3] sm:$0x1]
      %v1480 = vmul.f32 %v1479, 0.125
      %v1481 = vld [vmem:[#allocation2 + $0x4] sm:$0x1]
      %v1482 = vmul.f32 %v1481, 0.125
      %v1483 = vld [vmem:[#allocation3] sm:$0x1]
      %v1484 = vmul.f32 %v1483, 0.125
      %v1485 = vld [vmem:[#allocation3 + $0x1] sm:$0x1]
      %v1486 = vmul.f32 %v1485, 0.125
      %v1487 = vld [vmem:[#allocation3 + $0x2] sm:$0x1]
      %v1488 = vmul.f32 %v1487, 0.125
      %v1489 = vld [vmem:[#allocation3 + $0x3] sm:$0x1]
      %v1490 = vmul.f32 %v1489, 0.125
      %v1491 = vld [vmem:[#allocation3 + $0x4] sm:$0x1]
      %v1492 = vmul.f32 %v1491, 0.125
      %v1493 = vsub.f32 %v1474, %v1484
      %v1494 = vmul.f32 %v1493, %v1493
      %vm1495 = vcmask 1040384
      %v1496 = vsel %vm1495, %v1494, 0.0
      %1497 = vadd.xlane.f32.xlu0 %v1496
      %v1498 = vpop.xlane.xlu0 %1497
      %v1499 = vrot.slane %v1498, 4
      %v1500 = vadd.f32 %v1498, %v1499
      %v1501 = vrot.slane %v1500, 2
      %v1502 = vadd.f32 %v1500, %v1501
      %v1503 = vrot.slane %v1502, 1
      %v1504 = vadd.f32 %v1502, %v1503
      %s1505 = vtos %v1504
      %v1506 = vstv %s1505
      %v1507 = vrsqrt.pop %v1506
      %v1508 = vmul.f32 %v1506, %v1507
      %vm1509 = vcmp.eq.f32.partialorder %v1506, inf
      %v1510 = vsel %vm1509, %v1506, %v1508
      %vm1511 = vcmp.eq.f32.partialorder %v1506, 0.0
      %v1512 = vand.u32 %v1506, 2147483648
      %v1513 = vsel %vm1511, %v1512, %v1510
      %s1514 = vtos %v1513
      %v1515 = vsub.f32 0.0, %v1474
      %v1516 = vmul.f32 %v1515, %v1515
      %v1517 = vmul.f32 %v1474, 2.0
      %v1518 = vmul.f32 %v1517, %v1515
      %v1519 = vadd.f32 %v1516, %v1518
      %v1520 = vadd.f32 %v1519, %v1476
      %v1521 = vsub.f32 0.0, %v1484
      %v1522 = vmul.f32 %v1521, %v1521
      %v1523 = vmul.f32 %v1484, 2.0
      %v1524 = vmul.f32 %v1523, %v1521
      %v1525 = vadd.f32 %v1522, %v1524
      %v1526 = vadd.f32 %v1525, %v1486
      %v1527 = vsub.f32 %v1520, %v1526
      %v1528 = vmul.f32 %v1527, %v1527
      %v1529 = vsel %vm1495, %v1528, 0.0
      %1530 = vadd.xlane.f32.xlu0 %v1529
      %v1531 = vpop.xlane.xlu0 %1530
      %v1532 = vrot.slane %v1531, 4
      %v1533 = vadd.f32 %v1531, %v1532
      %v1534 = vrot.slane %v1533, 2
      %v1535 = vadd.f32 %v1533, %v1534
      %v1536 = vrot.slane %v1535, 1
      %v1537 = vadd.f32 %v1535, %v1536
      %s1538 = vtos %v1537
      %v1539 = vstv %s1538
      %v1540 = vrsqrt.pop %v1539
      %v1541 = vmul.f32 %v1539, %v1540
      %vm1542 = vcmp.eq.f32.partialorder %v1539, inf
      %v1543 = vsel %vm1542, %v1539, %v1541
      %vm1544 = vcmp.eq.f32.partialorder %v1539, 0.0
      %v1545 = vand.u32 %v1539, 2147483648
      %v1546 = vsel %vm1544, %v1545, %v1543
      %s1547 = vtos %v1546
      %s1548 = sadd.f32 %s1514, %s1547
      %v1549 = vmul.f32 %v1516, %v1515
      %v1550 = vmul.f32 %v1474, 3.0
      %v1551 = vmul.f32 %v1550, %v1516
      %v1552 = vadd.f32 %v1549, %v1551
      %v1553 = vmul.f32 %v1476, 3.0
      %v1554 = vmul.f32 %v1553, %v1515
      %v1555 = vadd.f32 %v1552, %v1554
      %v1556 = vadd.f32 %v1555, %v1478
      %v1557 = vmul.f32 %v1522, %v1521
      %v1558 = vmul.f32 %v1484, 3.0
      %v1559 = vmul.f32 %v1558, %v1522
      %v1560 = vadd.f32 %v1557, %v1559
      %v1561 = vmul.f32 %v1486, 3.0
      %v1562 = vmul.f32 %v1561, %v1521
      %v1563 = vadd.f32 %v1560, %v1562
      %v1564 = vadd.f32 %v1563, %v1488
      %v1565 = vsub.f32 %v1556, %v1564
      %v1566 = vmul.f32 %v1565, %v1565
      %v1567 = vsel %vm1495, %v1566, 0.0
      %1568 = vadd.xlane.f32.xlu0 %v1567
      %v1569 = vpop.xlane.xlu0 %1568
      %v1570 = vrot.slane %v1569, 4
      %v1571 = vadd.f32 %v1569, %v1570
      %v1572 = vrot.slane %v1571, 2
      %v1573 = vadd.f32 %v1571, %v1572
      %v1574 = vrot.slane %v1573, 1
      %v1575 = vadd.f32 %v1573, %v1574
      %s1576 = vtos %v1575
      %v1577 = vstv %s1576
      %v1578 = vrsqrt.pop %v1577
      %v1579 = vmul.f32 %v1577, %v1578
      %vm1580 = vcmp.eq.f32.partialorder %v1577, inf
      %v1581 = vsel %vm1580, %v1577, %v1579
      %vm1582 = vcmp.eq.f32.partialorder %v1577, 0.0
      %v1583 = vand.u32 %v1577, 2147483648
      %v1584 = vsel %vm1582, %v1583, %v1581
      %s1585 = vtos %v1584
      %s1586 = sadd.f32 %s1548, %s1585
      %v1587 = vmul.f32 %v1549, %v1515
      %v1588 = vmul.f32 %v1474, 4.0
      %v1589 = vmul.f32 %v1588, %v1549
      %v1590 = vadd.f32 %v1587, %v1589
      %v1591 = vmul.f32 %v1476, 6.0
      %v1592 = vmul.f32 %v1591, %v1516
      %v1593 = vadd.f32 %v1590, %v1592
      %v1594 = vmul.f32 %v1478, 4.0
      %v1595 = vmul.f32 %v1594, %v1515
      %v1596 = vadd.f32 %v1593, %v1595
      %v1597 = vadd.f32 %v1596, %v1480
      %v1598 = vmul.f32 %v1557, %v1521
      %v1599 = vmul.f32 %v1484, 4.0
      %v1600 = vmul.f32 %v1599, %v1557
      %v1601 = vadd.f32 %v1598, %v1600
      %v1602 = vmul.f32 %v1486, 6.0
      %v1603 = vmul.f32 %v1602, %v1522
      %v1604 = vadd.f32 %v1601, %v1603
      %v1605 = vmul.f32 %v1488, 4.0
      %v1606 = vmul.f32 %v1605, %v1521
      %v1607 = vadd.f32 %v1604, %v1606
      %v1608 = vadd.f32 %v1607, %v1490
      %v1609 = vsub.f32 %v1597, %v1608
      %v1610 = vmul.f32 %v1609, %v1609
      %v1611 = vsel %vm1495, %v1610, 0.0
      %1612 = vadd.xlane.f32.xlu0 %v1611
      %v1613 = vpop.xlane.xlu0 %1612
      %v1614 = vrot.slane %v1613, 4
      %v1615 = vadd.f32 %v1613, %v1614
      %v1616 = vrot.slane %v1615, 2
      %v1617 = vadd.f32 %v1615, %v1616
      %v1618 = vrot.slane %v1617, 1
      %v1619 = vadd.f32 %v1617, %v1618
      %s1620 = vtos %v1619
      %v1621 = vstv %s1620
      %v1622 = vrsqrt.pop %v1621
      %v1623 = vmul.f32 %v1621, %v1622
      %vm1624 = vcmp.eq.f32.partialorder %v1621, inf
      %v1625 = vsel %vm1624, %v1621, %v1623
      %vm1626 = vcmp.eq.f32.partialorder %v1621, 0.0
      %v1627 = vand.u32 %v1621, 2147483648
      %v1628 = vsel %vm1626, %v1627, %v1625
      %s1629 = vtos %v1628
      %s1630 = sadd.f32 %s1586, %s1629
      %v1631 = vmul.f32 %v1587, %v1515
      %v1632 = vmul.f32 %v1474, 5.0
      %v1633 = vmul.f32 %v1632, %v1587
      %v1634 = vadd.f32 %v1631, %v1633
      %v1635 = vmul.f32 %v1476, 10.0
      %v1636 = vmul.f32 %v1635, %v1549
      %v1637 = vadd.f32 %v1634, %v1636
      %v1638 = vmul.f32 %v1478, 10.0
      %v1639 = vmul.f32 %v1638, %v1516
      %v1640 = vadd.f32 %v1637, %v1639
      %v1641 = vmul.f32 %v1480, 5.0
      %v1642 = vmul.f32 %v1641, %v1515
      %v1643 = vadd.f32 %v1640, %v1642
      %v1644 = vadd.f32 %v1643, %v1482
      %v1645 = vmul.f32 %v1598, %v1521
      %v1646 = vmul.f32 %v1484, 5.0
      %v1647 = vmul.f32 %v1646, %v1598
      %v1648 = vadd.f32 %v1645, %v1647
      %v1649 = vmul.f32 %v1486, 10.0
      %v1650 = vmul.f32 %v1649, %v1557
      %v1651 = vadd.f32 %v1648, %v1650
      %v1652 = vmul.f32 %v1488, 10.0
      %v1653 = vmul.f32 %v1652, %v1522
      %v1654 = vadd.f32 %v1651, %v1653
      %v1655 = vmul.f32 %v1490, 5.0
      %v1656 = vmul.f32 %v1655, %v1521
      %v1657 = vadd.f32 %v1654, %v1656
      %v1658 = vadd.f32 %v1657, %v1492
      %v1659 = vsub.f32 %v1644, %v1658
      %v1660 = vmul.f32 %v1659, %v1659
      %v1661 = vsel %vm1495, %v1660, 0.0
      %1662 = vadd.xlane.f32.xlu0 %v1661
      %v1663 = vpop.xlane.xlu0 %1662
      %v1664 = vrot.slane %v1663, 4
      %v1665 = vadd.f32 %v1663, %v1664
      %v1666 = vrot.slane %v1665, 2
      %v1667 = vadd.f32 %v1665, %v1666
      %v1668 = vrot.slane %v1667, 1
      %v1669 = vadd.f32 %v1667, %v1668
      %s1670 = vtos %v1669
      %v1671 = vstv %s1670
      %v1672 = vrsqrt.pop %v1671
      %v1673 = vmul.f32 %v1671, %v1672
      %vm1674 = vcmp.eq.f32.partialorder %v1671, inf
      %v1675 = vsel %vm1674, %v1671, %v1673
      %vm1676 = vcmp.eq.f32.partialorder %v1671, 0.0
      %v1677 = vand.u32 %v1671, 2147483648
      %v1678 = vsel %vm1676, %v1677, %v1675
      %s1679 = vtos %v1678
      %s1680 = sadd.f32 %s1630, %s1679
      %v1681 = vstv %s1680
      %vm1682 = vcmask 0
      %1683 = vst.msk [vmem:[#allocation4] sm:$0x1] %vm1682, %v1681
    $region33: #{sim_loss.1} parent=1 // pred_fallthru
      _
    // Predicated region
    $region34: #{sim_loss.1} parent=1 // pred_check
      _
    $region35: #{sim_loss.1} parent=1 // pred_check_branch
      %1685 = sbr.rel (0) target = $region37
    $region36: #{sim_loss.1} parent=1 // pred_region
      %s1687 = ssub.s32 16, 16
      %1688 = vsyncadd [#allocation5], %s1687
      %s1690 = sshll.u32 [#allocation4], 4
      %s1691 = int_to_ptr.vmem [resolvable:$true] %s1690
      %1693 = dma.vmem_to_hbm [thread:$0]  %s1691, 16, %s6, [#allocation5]
    $region37: #{sim_loss.1} parent=1 // pred_fallthru
      _
    // Predicated region
    $region38: #{sim_loss.1} parent=1 // pred_check
      _
    $region39: #{sim_loss.1} parent=1 // pred_check_branch
      %1695 = sbr.rel (0) target = $region41
    $region40: #{sim_loss.1} parent=1 // pred_region
      %1696 = dma.done [#allocation5], 16
    $region41: #{sim_loss.1} parent=1 // pred_fallthru
      _
    %1697 = vsyncpa [#allocation5], 1

</llo_original>
